<compile_context>
chip_gen: v7x
topology: tpu7x:2x2x1
jax: 0.10.0
libtpu: 0.0.40
codegen_flags: <defaults>
</compile_context>

<pallas_src>
import functools
import math

import jax
import jax.numpy as jnp
from jax import lax
from jax.experimental import pallas as pl
from jax.experimental.pallas import tpu as pltpu

# ----------------------------- hyperparameters ------------------------------
# Small, shape-consistent configuration of the original module:
#   embedding_size=256->32, heads=8->4, seq_len=512->8, vocab_len=10000->50,
#   hidden_size=2048->64.  The module's broadcast
#   `positional_embedding + token_embed(x1)` requires token sequence length
#   S = seq_len + 1 = 9.
EMBED = 32
HEADS = 4
HEAD_DIM = EMBED // HEADS
SEQ_LEN = 8            # positional embedding has SEQ_LEN + 1 rows
S_TOK = SEQ_LEN + 1    # torch "batch" axis of the transformer layer (batch_first=False)
N_PAD = 16             # S_TOK padded to a sublane-aligned row count
VOCAB = 50             # embedding / lm_head have VOCAB + 1 rows
V1 = VOCAB + 1
HIDDEN = 64
LN_EPS = 1e-5
VPAD = 128             # lm-head output (and one-hot width) padded to a full lane tile
ATTN_SCALE = 1.0 / math.sqrt(HEAD_DIM)


# ------------------------------- fused kernel --------------------------------
def _layernorm(x, g, b):
    mean = jnp.mean(x, axis=-1, keepdims=True)
    var = jnp.mean(jnp.square(x - mean), axis=-1, keepdims=True)
    return (x - mean) * lax.rsqrt(var + LN_EPS) * g + b


def _fused_forward_kernel(
    tok_ref,                                     # (M, 1) int32 VMEM
    tok_emb_ref,                                 # (VPAD, E)   padded embedding table
    pos_ref,                                     # (M, E)      pre-tiled positional slab
    hsum_ref, hexp_ref,                          # (E, H) / (H, E) head select matrices
    wqkv_ref, bqkv_ref,                          # (E, 3E) / (1, 3E)
    wo_ref, bo_ref,
    ln1g_ref, ln1b_ref, ln2g_ref, ln2b_ref,
    w1_ref, b1_ref, w2_ref, b2_ref,
    lmw_ref, lmb_ref,
    out_ref,                                     # (M, VPAD) f32
):
    M = tok_ref.shape[0]
    E = EMBED
    L = M // N_PAD                               # torch "sequence" length (= wrapper batch)

    # ---- embedding gather via one-hot MXU matmul + positional add ----
    vocab_iota = lax.broadcasted_iota(jnp.int32, (M, VPAD), 1)
    one_hot = (vocab_iota == tok_ref[...]).astype(jnp.float32)          # (M, VPAD)
    x = jnp.dot(one_hot, tok_emb_ref[...],
                preferred_element_type=jnp.float32) + pos_ref[...]      # (M, E)

    # ---- self-attention block (pre-norm) ----
    h = _layernorm(x, ln1g_ref[...], ln1b_ref[...])
    qkv = jnp.dot(h, wqkv_ref[...], preferred_element_type=jnp.float32) + bqkv_ref[...]
    q = qkv[:, :E]
    k = qkv[:, E:2 * E]
    v = qkv[:, 2 * E:]

    # batch_first=False: attention mixes only across the L "sequence" rows that
    # share the same n; those rows are exactly multiples of N_PAD apart, so the
    # other sequence elements' k/v are tile-aligned sublane rolls of the slab.
    k_rolls = [k if j == 0 else pltpu.roll(k, shift=j * N_PAD, axis=0) for j in range(L)]
    v_rolls = [v if j == 0 else pltpu.roll(v, shift=j * N_PAD, axis=0) for j in range(L)]

    hsum = hsum_ref[...]                          # (E, H) head-sum selector
    scores = [jnp.dot(q * kj, hsum, preferred_element_type=jnp.float32) * ATTN_SCALE
              for kj in k_rolls]                  # each (M, H)
    smax = scores[0]
    for s in scores[1:]:
        smax = jnp.maximum(smax, s)
    exps = [jnp.exp(s - smax) for s in scores]
    denom = exps[0]
    for e in exps[1:]:
        denom = denom + e
    inv = pl.reciprocal(denom, approx=True)       # EUP, free slot

    hexp = hexp_ref[...]                          # (H, E) head-broadcast
    attn = jnp.dot(exps[0] * inv, hexp, preferred_element_type=jnp.float32) * v_rolls[0]
    for j in range(1, L):
        attn = attn + jnp.dot(exps[j] * inv, hexp,
                              preferred_element_type=jnp.float32) * v_rolls[j]

    attn = jnp.dot(attn, wo_ref[...], preferred_element_type=jnp.float32) + bo_ref[...]
    x = x + attn                                  # dropout1 == identity (eval)

    # ---- feed-forward block (pre-norm) ----
    h2 = _layernorm(x, ln2g_ref[...], ln2b_ref[...])
    ff = jnp.dot(h2, w1_ref[...], preferred_element_type=jnp.float32) + b1_ref[...]
    ff = jnp.maximum(ff, 0.0)
    ff = jnp.dot(ff, w2_ref[...], preferred_element_type=jnp.float32) + b2_ref[...]
    x = x + ff                                    # dropout2 == identity (eval)

    # ---- lm head (lane-padded to VPAD=128 output columns, unmasked stores) ----
    logits = jnp.dot(x, lmw_ref[...], preferred_element_type=jnp.float32) + lmb_ref[...]
    out_ref[...] = logits.astype(out_ref.dtype)


# ------------------------------ parameter setup -------------------------------
def init_params(key):
    ks = jax.random.split(key, 10)
    initrange = 0.1

    def uni(k, shape, bound):
        return jax.random.uniform(k, shape, jnp.float32, -bound, bound)

    kb = 1.0 / math.sqrt(EMBED)
    kh = 1.0 / math.sqrt(HIDDEN)
    return {
        'tok_emb': uni(ks[0], (V1, EMBED), initrange),
        'pos_emb': uni(ks[1], (S_TOK, EMBED), initrange),
        # MultiheadAttention packed qkv projection, stored (in, out).
        'in_proj_w': uni(ks[2], (EMBED, 3 * EMBED), kb),
        'in_proj_b': jnp.zeros((3 * EMBED,), jnp.float32),
        'out_proj_w': uni(ks[3], (EMBED, EMBED), kb),
        'out_proj_b': jnp.zeros((EMBED,), jnp.float32),
        'lin1_w': uni(ks[4], (EMBED, HIDDEN), kb),
        'lin1_b': uni(ks[5], (HIDDEN,), kb),
        'lin2_w': uni(ks[6], (HIDDEN, EMBED), kh),
        'lin2_b': uni(ks[7], (EMBED,), kh),
        'ln1_g': jnp.ones((EMBED,), jnp.float32),
        'ln1_b': jnp.zeros((EMBED,), jnp.float32),
        'ln2_g': jnp.ones((EMBED,), jnp.float32),
        'ln2_b': jnp.zeros((EMBED,), jnp.float32),
        'lm_w': uni(ks[8], (EMBED, V1), kb),
        'lm_b': uni(ks[9], (V1,), kb),
    }


_PARAM_ORDER = ('tok_emb', 'pos', 'hsum', 'hexp', 'wqkv', 'bqkv', 'wo', 'bo',
                'ln1g', 'ln1b', 'ln2g', 'ln2b', 'w1', 'b1', 'w2', 'b2',
                'lm_w', 'lm_b')


def prepare_params(p, batch):
    """One-time packing into the kernel-friendly layout (done outside the jit)."""
    row = lambda vec: vec.reshape(1, -1)
    # Head-sum (E,H) / head-broadcast (H,E) selection matrices (hoisted).
    lane = jnp.arange(EMBED)[:, None] // HEAD_DIM
    head = jnp.arange(HEADS)[None, :]
    hsum = (lane == head).astype(jnp.float32)
    hexp = hsum.T
    # Positional slab: pad S_TOK -> N_PAD rows, tile across the batch.
    pos = jnp.pad(p['pos_emb'], ((0, N_PAD - S_TOK), (0, 0)))
    pos_slab = jnp.tile(pos, (batch, 1))                       # (batch*N_PAD, E)
    vpad = VPAD - V1
    return {
        'tok_emb': jnp.pad(p['tok_emb'], ((0, VPAD - V1), (0, 0))),   # (VPAD, E)
        'pos': pos_slab,
        'hsum': hsum, 'hexp': hexp,
        'wqkv': p['in_proj_w'], 'bqkv': row(p['in_proj_b']),
        'wo': p['out_proj_w'], 'bo': row(p['out_proj_b']),
        'ln1g': row(p['ln1_g']), 'ln1b': row(p['ln1_b']),
        'ln2g': row(p['ln2_g']), 'ln2b': row(p['ln2_b']),
        'w1': p['lin1_w'], 'b1': row(p['lin1_b']),
        'w2': p['lin2_w'], 'b2': row(p['lin2_b']),
        'lm_w': jnp.pad(p['lm_w'], ((0, 0), (0, vpad))),
        'lm_b': row(jnp.pad(p['lm_b'], (0, vpad))),
    }


def _zero_index_map(ndim, *_):
    return (0,) * ndim


# --------------------------------- forward -----------------------------------
@jax.jit
def model_forward(prepared, tokens):
    """tokens: (B, S) int32, S must equal SEQ_LEN + 1 (pos-emb broadcast)."""
    B, S = tokens.shape
    assert S == S_TOK, S
    M = B * N_PAD

    # Pad the torch "batch" axis to a sublane-aligned row count; padded rows use
    # token id 0 and never influence real rows (attention mixes only across B).
    tok_col = jnp.pad(tokens.astype(jnp.int32),
                      ((0, 0), (0, N_PAD - S))).reshape(M, 1)

    arrays = [prepared[k] for k in _PARAM_ORDER]
    in_specs = (
        [pl.BlockSpec(tok_col.shape, functools.partial(_zero_index_map, 2))] +
        [pl.BlockSpec(a.shape, functools.partial(_zero_index_map, a.ndim))
         for a in arrays])

    out = pl.pallas_call(
        _fused_forward_kernel,
        out_shape=jax.ShapeDtypeStruct((M, VPAD), jnp.float32),
        grid_spec=pltpu.PrefetchScalarGridSpec(
            num_scalar_prefetch=0,
            grid=(1,),
            in_specs=in_specs,
            out_specs=pl.BlockSpec((M, VPAD), functools.partial(_zero_index_map, 2)),
        ),
        compiler_params=pltpu.CompilerParams(
            dimension_semantics=("arbitrary",)),
    )(tok_col, *arrays)

    return out.reshape(B, N_PAD, VPAD)[:, :S, :V1]


# ------------------------- pure-JAX reference (check) -------------------------
def reference_forward(params, tokens):
    B, S = tokens.shape
    L, N, E, H, Dh = B, S, EMBED, HEADS, HEAD_DIM
    emb = jnp.take(params['tok_emb'], tokens, axis=0)
    x = params['pos_emb'][None, :, :] + emb
    x2 = x.reshape(L * N, E)

    def ln(t, g, b):
        mu = t.mean(-1, keepdims=True)
        var = ((t - mu) ** 2).mean(-1, keepdims=True)
        return (t - mu) / jnp.sqrt(var + LN_EPS) * g + b

    h = ln(x2, params['ln1_g'], params['ln1_b'])
    qkv = h @ params['in_proj_w'] + params['in_proj_b']
    q, k, v = jnp.split(qkv, 3, axis=-1)

    def to_heads(t):
        return t.reshape(L, N * H, Dh).transpose(1, 0, 2)

    qh, kh, vh = map(to_heads, (q, k, v))
    s = jnp.einsum('bld,bmd->blm', qh / math.sqrt(Dh), kh)
    p = jax.nn.softmax(s, axis=-1)
    o = jnp.einsum('blm,bmd->bld', p, vh).transpose(1, 0, 2).reshape(L * N, E)
    attn = o @ params['out_proj_w'] + params['out_proj_b']
    x2 = x2 + attn
    h2 = ln(x2, params['ln2_g'], params['ln2_b'])
    ff = jax.nn.relu(h2 @ params['lin1_w'] + params['lin1_b'])
    ff = ff @ params['lin2_w'] + params['lin2_b']
    x2 = x2 + ff
    logits = x2 @ params['lm_w'] + params['lm_b']
    return logits.reshape(B, S, V1)


# ----------------------------------- main -------------------------------------
if __name__ == "__main__":
    key = jax.random.PRNGKey(0)
    pkey, xkey = jax.random.split(key)
    params = init_params(pkey)

    # Integer token ids (the original script passes floats to an Embedding,
    # which is invalid; integer token ids are the intended semantics).
    B, S = 2, S_TOK
    prepared = prepare_params(params, batch=B)   # one-time weight packing
    tokens = jax.random.randint(xkey, (B, S), 0, V1, dtype=jnp.int32)

    out = model_forward(prepared, tokens)
    out = jax.block_until_ready(out)
    assert out.shape == (B, S, V1), out.shape
    assert bool(jnp.all(jnp.isfinite(out)))

    ref = reference_forward(params, tokens)
    assert bool(jnp.allclose(out, ref, atol=5e-2, rtol=5e-2)), \
        float(jnp.max(jnp.abs(out - ref)))

    print("KERNEL_OK")
</pallas_src>

<mosaic_0001>
module attributes {stable_mosaic.version = 11 : i64} {
  func.func @_fused_forward_kernel(%arg0: i32, %arg1: memref<32x1xi32, #tpu.memory_space<vmem>>, %arg2: memref<128x32xf32, #tpu.memory_space<vmem>>, %arg3: memref<32x32xf32, #tpu.memory_space<vmem>>, %arg4: memref<32x4xf32, #tpu.memory_space<vmem>>, %arg5: memref<4x32xf32, #tpu.memory_space<vmem>>, %arg6: memref<32x96xf32, #tpu.memory_space<vmem>>, %arg7: memref<1x96xf32, #tpu.memory_space<vmem>>, %arg8: memref<32x32xf32, #tpu.memory_space<vmem>>, %arg9: memref<1x32xf32, #tpu.memory_space<vmem>>, %arg10: memref<1x32xf32, #tpu.memory_space<vmem>>, %arg11: memref<1x32xf32, #tpu.memory_space<vmem>>, %arg12: memref<1x32xf32, #tpu.memory_space<vmem>>, %arg13: memref<1x32xf32, #tpu.memory_space<vmem>>, %arg14: memref<32x64xf32, #tpu.memory_space<vmem>>, %arg15: memref<1x64xf32, #tpu.memory_space<vmem>>, %arg16: memref<64x32xf32, #tpu.memory_space<vmem>>, %arg17: memref<1x32xf32, #tpu.memory_space<vmem>>, %arg18: memref<32x128xf32, #tpu.memory_space<vmem>>, %arg19: memref<1x128xf32, #tpu.memory_space<vmem>>, %arg20: memref<32x128xf32, #tpu.memory_space<vmem>>) attributes {dimension_semantics = [#tpu.dimension_semantics<arbitrary>], iteration_bounds = array<i64: 1>, scalar_prefetch = 0 : i64, scratch_operands = 0 : i64, tpu.core_type = #tpu.core_type<tc>, window_params = [{pipeline_mode = #tpu.pipeline_mode<synchronous>, transform_indices = @transform_0, window_bounds = array<i64: 32, 1>}, {pipeline_mode = #tpu.pipeline_mode<synchronous>, transform_indices = @transform_1, window_bounds = array<i64: 128, 32>}, {pipeline_mode = #tpu.pipeline_mode<synchronous>, transform_indices = @transform_2, window_bounds = array<i64: 32, 32>}, {pipeline_mode = #tpu.pipeline_mode<synchronous>, transform_indices = @transform_3, window_bounds = array<i64: 32, 4>}, {pipeline_mode = #tpu.pipeline_mode<synchronous>, transform_indices = @transform_4, window_bounds = array<i64: 4, 32>}, {pipeline_mode = #tpu.pipeline_mode<synchronous>, transform_indices = @transform_5, window_bounds = array<i64: 32, 96>}, {pipeline_mode = #tpu.pipeline_mode<synchronous>, transform_indices = @transform_6, window_bounds = array<i64: 1, 96>}, {pipeline_mode = #tpu.pipeline_mode<synchronous>, transform_indices = @transform_7, window_bounds = array<i64: 32, 32>}, {pipeline_mode = #tpu.pipeline_mode<synchronous>, transform_indices = @transform_8, window_bounds = array<i64: 1, 32>}, {pipeline_mode = #tpu.pipeline_mode<synchronous>, transform_indices = @transform_9, window_bounds = array<i64: 1, 32>}, {pipeline_mode = #tpu.pipeline_mode<synchronous>, transform_indices = @transform_10, window_bounds = array<i64: 1, 32>}, {pipeline_mode = #tpu.pipeline_mode<synchronous>, transform_indices = @transform_11, window_bounds = array<i64: 1, 32>}, {pipeline_mode = #tpu.pipeline_mode<synchronous>, transform_indices = @transform_12, window_bounds = array<i64: 1, 32>}, {pipeline_mode = #tpu.pipeline_mode<synchronous>, transform_indices = @transform_13, window_bounds = array<i64: 32, 64>}, {pipeline_mode = #tpu.pipeline_mode<synchronous>, transform_indices = @transform_14, window_bounds = array<i64: 1, 64>}, {pipeline_mode = #tpu.pipeline_mode<synchronous>, transform_indices = @transform_15, window_bounds = array<i64: 64, 32>}, {pipeline_mode = #tpu.pipeline_mode<synchronous>, transform_indices = @transform_16, window_bounds = array<i64: 1, 32>}, {pipeline_mode = #tpu.pipeline_mode<synchronous>, transform_indices = @transform_17, window_bounds = array<i64: 32, 128>}, {pipeline_mode = #tpu.pipeline_mode<synchronous>, transform_indices = @transform_18, window_bounds = array<i64: 1, 128>}, {pipeline_mode = #tpu.pipeline_mode<synchronous>, transform_indices = @transform_19, window_bounds = array<i64: 32, 128>}]} {
    %0 = tpu.iota {dimensions = array<i32: 1>} : vector<32x128xi32>
    %c0 = arith.constant 0 : index
    %c0_0 = arith.constant 0 : index
    %1 = vector.load %arg1[%c0, %c0_0] : memref<32x1xi32, #tpu.memory_space<vmem>>, vector<32x1xi32>
    %2 = vector.broadcast %1 : vector<32x1xi32> to vector<32x128xi32>
    %3 = arith.cmpi eq, %0, %2 : vector<32x128xi32>
    %4 = arith.extui %3 : vector<32x128xi1> to vector<32x128xi32>
    %5 = arith.sitofp %4 : vector<32x128xi32> to vector<32x128xf32>
    %c0_1 = arith.constant 0 : index
    %c0_2 = arith.constant 0 : index
    %6 = vector.load %arg2[%c0_1, %c0_2] : memref<128x32xf32, #tpu.memory_space<vmem>>, vector<128x32xf32>
    %cst = arith.constant dense<0.000000e+00> : vector<32x32xf32>
    %7 = tpu.matmul %5, %6, %cst {dimension_numbers = #tpu.dot_dimension_numbers<[1], [0], [0], [1], [0, 0, 1, 1], [], []>} : vector<32x128xf32>, vector<128x32xf32>, vector<32x32xf32> -> vector<32x32xf32>
    %c0_3 = arith.constant 0 : index
    %c0_4 = arith.constant 0 : index
    %8 = vector.load %arg3[%c0_3, %c0_4] : memref<32x32xf32, #tpu.memory_space<vmem>>, vector<32x32xf32>
    %9 = arith.addf %7, %8 : vector<32x32xf32>
    %c0_5 = arith.constant 0 : index
    %c0_6 = arith.constant 0 : index
    %10 = vector.load %arg10[%c0_5, %c0_6] : memref<1x32xf32, #tpu.memory_space<vmem>>, vector<1x32xf32>
    %c0_7 = arith.constant 0 : index
    %c0_8 = arith.constant 0 : index
    %11 = vector.load %arg11[%c0_7, %c0_8] : memref<1x32xf32, #tpu.memory_space<vmem>>, vector<1x32xf32>
    %cst_9 = arith.constant dense<0.000000e+00> : vector<32xf32>
    %12 = vector.multi_reduction <add>, %9, %cst_9 [1] : vector<32x32xf32> to vector<32xf32>
    %13 = vector.shape_cast %12 : vector<32xf32> to vector<32x1xf32>
    %cst_10 = arith.constant 3.200000e+01 : f32
    %14 = vector.broadcast %cst_10 : f32 to vector<32x1xf32>
    %15 = arith.divf %13, %14 : vector<32x1xf32>
    %16 = vector.broadcast %15 : vector<32x1xf32> to vector<32x32xf32>
    %17 = arith.subf %9, %16 : vector<32x32xf32>
    %18 = arith.mulf %17, %17 : vector<32x32xf32>
    %cst_11 = arith.constant dense<0.000000e+00> : vector<32xf32>
    %19 = vector.multi_reduction <add>, %18, %cst_11 [1] : vector<32x32xf32> to vector<32xf32>
    %20 = vector.shape_cast %19 : vector<32xf32> to vector<32x1xf32>
    %cst_12 = arith.constant 3.200000e+01 : f32
    %21 = vector.broadcast %cst_12 : f32 to vector<32x1xf32>
    %22 = arith.divf %20, %21 : vector<32x1xf32>
    %23 = vector.broadcast %15 : vector<32x1xf32> to vector<32x32xf32>
    %24 = arith.subf %9, %23 : vector<32x32xf32>
    %cst_13 = arith.constant 9.99999974E-6 : f32
    %25 = vector.broadcast %cst_13 : f32 to vector<32x1xf32>
    %26 = arith.addf %22, %25 : vector<32x1xf32>
    %27 = math.rsqrt %26 : vector<32x1xf32>
    %28 = vector.broadcast %27 : vector<32x1xf32> to vector<32x32xf32>
    %29 = arith.mulf %24, %28 : vector<32x32xf32>
    %30 = vector.broadcast %10 : vector<1x32xf32> to vector<32x32xf32>
    %31 = arith.mulf %29, %30 : vector<32x32xf32>
    %32 = vector.broadcast %11 : vector<1x32xf32> to vector<32x32xf32>
    %33 = arith.addf %31, %32 : vector<32x32xf32>
    %c0_14 = arith.constant 0 : index
    %c0_15 = arith.constant 0 : index
    %34 = vector.load %arg6[%c0_14, %c0_15] : memref<32x96xf32, #tpu.memory_space<vmem>>, vector<32x96xf32>
    %cst_16 = arith.constant dense<0.000000e+00> : vector<32x96xf32>
    %35 = tpu.matmul %33, %34, %cst_16 {dimension_numbers = #tpu.dot_dimension_numbers<[1], [0], [0], [1], [0, 0, 1, 1], [], []>} : vector<32x32xf32>, vector<32x96xf32>, vector<32x96xf32> -> vector<32x96xf32>
    %c0_17 = arith.constant 0 : index
    %c0_18 = arith.constant 0 : index
    %36 = vector.load %arg7[%c0_17, %c0_18] : memref<1x96xf32, #tpu.memory_space<vmem>>, vector<1x96xf32>
    %37 = vector.broadcast %36 : vector<1x96xf32> to vector<32x96xf32>
    %38 = arith.addf %35, %37 : vector<32x96xf32>
    %39 = vector.extract_strided_slice %38 {offsets = [0, 0], sizes = [32, 32], strides = [1, 1]} : vector<32x96xf32> to vector<32x32xf32>
    %40 = vector.extract_strided_slice %38 {offsets = [0, 32], sizes = [32, 32], strides = [1, 1]} : vector<32x96xf32> to vector<32x32xf32>
    %41 = vector.extract_strided_slice %38 {offsets = [0, 64], sizes = [32, 32], strides = [1, 1]} : vector<32x96xf32> to vector<32x32xf32>
    %c16_i32 = arith.constant 16 : i32
    %42 = tpu.dynamic_rotate %40 by %c16_i32 dim 0 : vector<32x32xf32>, i32 -> vector<32x32xf32>
    %c16_i32_19 = arith.constant 16 : i32
    %43 = tpu.dynamic_rotate %41 by %c16_i32_19 dim 0 : vector<32x32xf32>, i32 -> vector<32x32xf32>
    %c0_20 = arith.constant 0 : index
    %c0_21 = arith.constant 0 : index
    %44 = vector.load %arg4[%c0_20, %c0_21] : memref<32x4xf32, #tpu.memory_space<vmem>>, vector<32x4xf32>
    %45 = arith.mulf %39, %40 : vector<32x32xf32>
    %cst_22 = arith.constant dense<0.000000e+00> : vector<32x4xf32>
    %46 = tpu.matmul %45, %44, %cst_22 {dimension_numbers = #tpu.dot_dimension_numbers<[1], [0], [0], [1], [0, 0, 1, 1], [], []>} : vector<32x32xf32>, vector<32x4xf32>, vector<32x4xf32> -> vector<32x4xf32>
    %cst_23 = arith.constant 0.353553385 : f32
    %47 = vector.broadcast %cst_23 : f32 to vector<32x4xf32>
    %48 = arith.mulf %46, %47 : vector<32x4xf32>
    %49 = arith.mulf %39, %42 : vector<32x32xf32>
    %cst_24 = arith.constant dense<0.000000e+00> : vector<32x4xf32>
    %50 = tpu.matmul %49, %44, %cst_24 {dimension_numbers = #tpu.dot_dimension_numbers<[1], [0], [0], [1], [0, 0, 1, 1], [], []>} : vector<32x32xf32>, vector<32x4xf32>, vector<32x4xf32> -> vector<32x4xf32>
    %cst_25 = arith.constant 0.353553385 : f32
    %51 = vector.broadcast %cst_25 : f32 to vector<32x4xf32>
    %52 = arith.mulf %50, %51 : vector<32x4xf32>
    %53 = arith.maximumf %48, %52 : vector<32x4xf32>
    %54 = arith.subf %48, %53 : vector<32x4xf32>
    %55 = math.exp %54 : vector<32x4xf32>
    %56 = arith.subf %52, %53 : vector<32x4xf32>
    %57 = math.exp %56 : vector<32x4xf32>
    %58 = arith.addf %55, %57 : vector<32x4xf32>
    %59 = tpu.reciprocal %58 {approx = true} : vector<32x4xf32> -> vector<32x4xf32>
    %c0_26 = arith.constant 0 : index
    %c0_27 = arith.constant 0 : index
    %60 = vector.load %arg5[%c0_26, %c0_27] : memref<4x32xf32, #tpu.memory_space<vmem>>, vector<4x32xf32>
    %61 = arith.mulf %55, %59 : vector<32x4xf32>
    %cst_28 = arith.constant dense<0.000000e+00> : vector<32x32xf32>
    %62 = tpu.matmul %61, %60, %cst_28 {dimension_numbers = #tpu.dot_dimension_numbers<[1], [0], [0], [1], [0, 0, 1, 1], [], []>} : vector<32x4xf32>, vector<4x32xf32>, vector<32x32xf32> -> vector<32x32xf32>
    %63 = arith.mulf %62, %41 : vector<32x32xf32>
    %64 = arith.mulf %57, %59 : vector<32x4xf32>
    %cst_29 = arith.constant dense<0.000000e+00> : vector<32x32xf32>
    %65 = tpu.matmul %64, %60, %cst_29 {dimension_numbers = #tpu.dot_dimension_numbers<[1], [0], [0], [1], [0, 0, 1, 1], [], []>} : vector<32x4xf32>, vector<4x32xf32>, vector<32x32xf32> -> vector<32x32xf32>
    %66 = arith.mulf %65, %43 : vector<32x32xf32>
    %67 = arith.addf %63, %66 : vector<32x32xf32>
    %c0_30 = arith.constant 0 : index
    %c0_31 = arith.constant 0 : index
    %68 = vector.load %arg8[%c0_30, %c0_31] : memref<32x32xf32, #tpu.memory_space<vmem>>, vector<32x32xf32>
    %cst_32 = arith.constant dense<0.000000e+00> : vector<32x32xf32>
    %69 = tpu.matmul %67, %68, %cst_32 {dimension_numbers = #tpu.dot_dimension_numbers<[1], [0], [0], [1], [0, 0, 1, 1], [], []>} : vector<32x32xf32>, vector<32x32xf32>, vector<32x32xf32> -> vector<32x32xf32>
    %c0_33 = arith.constant 0 : index
    %c0_34 = arith.constant 0 : index
    %70 = vector.load %arg9[%c0_33, %c0_34] : memref<1x32xf32, #tpu.memory_space<vmem>>, vector<1x32xf32>
    %71 = vector.broadcast %70 : vector<1x32xf32> to vector<32x32xf32>
    %72 = arith.addf %69, %71 : vector<32x32xf32>
    %73 = arith.addf %9, %72 : vector<32x32xf32>
    %c0_35 = arith.constant 0 : index
    %c0_36 = arith.constant 0 : index
    %74 = vector.load %arg12[%c0_35, %c0_36] : memref<1x32xf32, #tpu.memory_space<vmem>>, vector<1x32xf32>
    %c0_37 = arith.constant 0 : index
    %c0_38 = arith.constant 0 : index
    %75 = vector.load %arg13[%c0_37, %c0_38] : memref<1x32xf32, #tpu.memory_space<vmem>>, vector<1x32xf32>
    %cst_39 = arith.constant dense<0.000000e+00> : vector<32xf32>
    %76 = vector.multi_reduction <add>, %73, %cst_39 [1] : vector<32x32xf32> to vector<32xf32>
    %77 = vector.shape_cast %76 : vector<32xf32> to vector<32x1xf32>
    %cst_40 = arith.constant 3.200000e+01 : f32
    %78 = vector.broadcast %cst_40 : f32 to vector<32x1xf32>
    %79 = arith.divf %77, %78 : vector<32x1xf32>
    %80 = vector.broadcast %79 : vector<32x1xf32> to vector<32x32xf32>
    %81 = arith.subf %73, %80 : vector<32x32xf32>
    %82 = arith.mulf %81, %81 : vector<32x32xf32>
    %cst_41 = arith.constant dense<0.000000e+00> : vector<32xf32>
    %83 = vector.multi_reduction <add>, %82, %cst_41 [1] : vector<32x32xf32> to vector<32xf32>
    %84 = vector.shape_cast %83 : vector<32xf32> to vector<32x1xf32>
    %cst_42 = arith.constant 3.200000e+01 : f32
    %85 = vector.broadcast %cst_42 : f32 to vector<32x1xf32>
    %86 = arith.divf %84, %85 : vector<32x1xf32>
    %87 = vector.broadcast %79 : vector<32x1xf32> to vector<32x32xf32>
    %88 = arith.subf %73, %87 : vector<32x32xf32>
    %cst_43 = arith.constant 9.99999974E-6 : f32
    %89 = vector.broadcast %cst_43 : f32 to vector<32x1xf32>
    %90 = arith.addf %86, %89 : vector<32x1xf32>
    %91 = math.rsqrt %90 : vector<32x1xf32>
    %92 = vector.broadcast %91 : vector<32x1xf32> to vector<32x32xf32>
    %93 = arith.mulf %88, %92 : vector<32x32xf32>
    %94 = vector.broadcast %74 : vector<1x32xf32> to vector<32x32xf32>
    %95 = arith.mulf %93, %94 : vector<32x32xf32>
    %96 = vector.broadcast %75 : vector<1x32xf32> to vector<32x32xf32>
    %97 = arith.addf %95, %96 : vector<32x32xf32>
    %c0_44 = arith.constant 0 : index
    %c0_45 = arith.constant 0 : index
    %98 = vector.load %arg14[%c0_44, %c0_45] : memref<32x64xf32, #tpu.memory_space<vmem>>, vector<32x64xf32>
    %cst_46 = arith.constant dense<0.000000e+00> : vector<32x64xf32>
    %99 = tpu.matmul %97, %98, %cst_46 {dimension_numbers = #tpu.dot_dimension_numbers<[1], [0], [0], [1], [0, 0, 1, 1], [], []>} : vector<32x32xf32>, vector<32x64xf32>, vector<32x64xf32> -> vector<32x64xf32>
    %c0_47 = arith.constant 0 : index
    %c0_48 = arith.constant 0 : index
    %100 = vector.load %arg15[%c0_47, %c0_48] : memref<1x64xf32, #tpu.memory_space<vmem>>, vector<1x64xf32>
    %101 = vector.broadcast %100 : vector<1x64xf32> to vector<32x64xf32>
    %102 = arith.addf %99, %101 : vector<32x64xf32>
    %cst_49 = arith.constant 0.000000e+00 : f32
    %103 = vector.broadcast %cst_49 : f32 to vector<32x64xf32>
    %104 = arith.maximumf %102, %103 : vector<32x64xf32>
    %c0_50 = arith.constant 0 : index
    %c0_51 = arith.constant 0 : index
    %105 = vector.load %arg16[%c0_50, %c0_51] : memref<64x32xf32, #tpu.memory_space<vmem>>, vector<64x32xf32>
    %cst_52 = arith.constant dense<0.000000e+00> : vector<32x32xf32>
    %106 = tpu.matmul %104, %105, %cst_52 {dimension_numbers = #tpu.dot_dimension_numbers<[1], [0], [0], [1], [0, 0, 1, 1], [], []>} : vector<32x64xf32>, vector<64x32xf32>, vector<32x32xf32> -> vector<32x32xf32>
    %c0_53 = arith.constant 0 : index
    %c0_54 = arith.constant 0 : index
    %107 = vector.load %arg17[%c0_53, %c0_54] : memref<1x32xf32, #tpu.memory_space<vmem>>, vector<1x32xf32>
    %108 = vector.broadcast %107 : vector<1x32xf32> to vector<32x32xf32>
    %109 = arith.addf %106, %108 : vector<32x32xf32>
    %110 = arith.addf %73, %109 : vector<32x32xf32>
    %c0_55 = arith.constant 0 : index
    %c0_56 = arith.constant 0 : index
    %111 = vector.load %arg18[%c0_55, %c0_56] : memref<32x128xf32, #tpu.memory_space<vmem>>, vector<32x128xf32>
    %cst_57 = arith.constant dense<0.000000e+00> : vector<32x128xf32>
    %112 = tpu.matmul %110, %111, %cst_57 {dimension_numbers = #tpu.dot_dimension_numbers<[1], [0], [0], [1], [0, 0, 1, 1], [], []>} : vector<32x32xf32>, vector<32x128xf32>, vector<32x128xf32> -> vector<32x128xf32>
    %c0_58 = arith.constant 0 : index
    %c0_59 = arith.constant 0 : index
    %113 = vector.load %arg19[%c0_58, %c0_59] : memref<1x128xf32, #tpu.memory_space<vmem>>, vector<1x128xf32>
    %114 = vector.broadcast %113 : vector<1x128xf32> to vector<32x128xf32>
    %115 = arith.addf %112, %114 : vector<32x128xf32>
    %c0_60 = arith.constant 0 : index
    %c0_61 = arith.constant 0 : index
    %116 = vector.load %arg20[%c0_60, %c0_61] : memref<32x128xf32, #tpu.memory_space<vmem>>, vector<32x128xf32>
    tpu.vector_store %arg20[%c0_60, %c0_61], %115 {strides = array<i32>} : memref<32x128xf32, #tpu.memory_space<vmem>>, vector<32x128xf32>,
    return
  }
  func.func @transform_0(%arg0: i32) -> (i32, i32) {
    %c0_i32 = arith.constant 0 : i32
    %c0_i32_0 = arith.constant 0 : i32
    %c0_i32_1 = arith.constant 0 : i32
    return %c0_i32, %c0_i32_0 : i32, i32
  }
  func.func @transform_1(%arg0: i32) -> (i32, i32) {
    %c0_i32 = arith.constant 0 : i32
    %c0_i32_0 = arith.constant 0 : i32
    %c0_i32_1 = arith.constant 0 : i32
    return %c0_i32, %c0_i32_0 : i32, i32
  }
  func.func @transform_2(%arg0: i32) -> (i32, i32) {
    %c0_i32 = arith.constant 0 : i32
    %c0_i32_0 = arith.constant 0 : i32
    %c0_i32_1 = arith.constant 0 : i32
    return %c0_i32, %c0_i32_0 : i32, i32
  }
  func.func @transform_3(%arg0: i32) -> (i32, i32) {
    %c0_i32 = arith.constant 0 : i32
    %c0_i32_0 = arith.constant 0 : i32
    %c0_i32_1 = arith.constant 0 : i32
    return %c0_i32, %c0_i32_0 : i32, i32
  }
  func.func @transform_4(%arg0: i32) -> (i32, i32) {
    %c0_i32 = arith.constant 0 : i32
    %c0_i32_0 = arith.constant 0 : i32
    %c0_i32_1 = arith.constant 0 : i32
    return %c0_i32, %c0_i32_0 : i32, i32
  }
  func.func @transform_5(%arg0: i32) -> (i32, i32) {
    %c0_i32 = arith.constant 0 : i32
    %c0_i32_0 = arith.constant 0 : i32
    %c0_i32_1 = arith.constant 0 : i32
    return %c0_i32, %c0_i32_0 : i32, i32
  }
  func.func @transform_6(%arg0: i32) -> (i32, i32) {
    %c0_i32 = arith.constant 0 : i32
    %c0_i32_0 = arith.constant 0 : i32
    %c0_i32_1 = arith.constant 0 : i32
    return %c0_i32, %c0_i32_0 : i32, i32
  }
  func.func @transform_7(%arg0: i32) -> (i32, i32) {
    %c0_i32 = arith.constant 0 : i32
    %c0_i32_0 = arith.constant 0 : i32
    %c0_i32_1 = arith.constant 0 : i32
    return %c0_i32, %c0_i32_0 : i32, i32
  }
  func.func @transform_8(%arg0: i32) -> (i32, i32) {
    %c0_i32 = arith.constant 0 : i32
    %c0_i32_0 = arith.constant 0 : i32
    %c0_i32_1 = arith.constant 0 : i32
    return %c0_i32, %c0_i32_0 : i32, i32
  }
  func.func @transform_9(%arg0: i32) -> (i32, i32) {
    %c0_i32 = arith.constant 0 : i32
    %c0_i32_0 = arith.constant 0 : i32
    %c0_i32_1 = arith.constant 0 : i32
    return %c0_i32, %c0_i32_0 : i32, i32
  }
  func.func @transform_10(%arg0: i32) -> (i32, i32) {
    %c0_i32 = arith.constant 0 : i32
    %c0_i32_0 = arith.constant 0 : i32
    %c0_i32_1 = arith.constant 0 : i32
    return %c0_i32, %c0_i32_0 : i32, i32
  }
  func.func @transform_11(%arg0: i32) -> (i32, i32) {
    %c0_i32 = arith.constant 0 : i32
    %c0_i32_0 = arith.constant 0 : i32
    %c0_i32_1 = arith.constant 0 : i32
    return %c0_i32, %c0_i32_0 : i32, i32
  }
  func.func @transform_12(%arg0: i32) -> (i32, i32) {
    %c0_i32 = arith.constant 0 : i32
    %c0_i32_0 = arith.constant 0 : i32
    %c0_i32_1 = arith.constant 0 : i32
    return %c0_i32, %c0_i32_0 : i32, i32
  }
  func.func @transform_13(%arg0: i32) -> (i32, i32) {
    %c0_i32 = arith.constant 0 : i32
    %c0_i32_0 = arith.constant 0 : i32
    %c0_i32_1 = arith.constant 0 : i32
    return %c0_i32, %c0_i32_0 : i32, i32
  }
  func.func @transform_14(%arg0: i32) -> (i32, i32) {
    %c0_i32 = arith.constant 0 : i32
    %c0_i32_0 = arith.constant 0 : i32
    %c0_i32_1 = arith.constant 0 : i32
    return %c0_i32, %c0_i32_0 : i32, i32
  }
  func.func @transform_15(%arg0: i32) -> (i32, i32) {
    %c0_i32 = arith.constant 0 : i32
    %c0_i32_0 = arith.constant 0 : i32
    %c0_i32_1 = arith.constant 0 : i32
    return %c0_i32, %c0_i32_0 : i32, i32
  }
  func.func @transform_16(%arg0: i32) -> (i32, i32) {
    %c0_i32 = arith.constant 0 : i32
    %c0_i32_0 = arith.constant 0 : i32
    %c0_i32_1 = arith.constant 0 : i32
    return %c0_i32, %c0_i32_0 : i32, i32
  }
  func.func @transform_17(%arg0: i32) -> (i32, i32) {
    %c0_i32 = arith.constant 0 : i32
    %c0_i32_0 = arith.constant 0 : i32
    %c0_i32_1 = arith.constant 0 : i32
    return %c0_i32, %c0_i32_0 : i32, i32
  }
  func.func @transform_18(%arg0: i32) -> (i32, i32) {
    %c0_i32 = arith.constant 0 : i32
    %c0_i32_0 = arith.constant 0 : i32
    %c0_i32_1 = arith.constant 0 : i32
    return %c0_i32, %c0_i32_0 : i32, i32
  }
  func.func @transform_19(%arg0: i32) -> (i32, i32) {
    %c0_i32 = arith.constant 0 : i32
    %c0_i32_0 = arith.constant 0 : i32
    %c0_i32_1 = arith.constant 0 : i32
    return %c0_i32, %c0_i32_0 : i32, i32
  }
}

</mosaic_0001>

<llo_original>
// kernel: model_forward.1
$region0: #{model_forward.1}
  #allocation0 [shape = 'u32[]', space=smem, size = 0x4, offset = 0x4, fixed_abs, tag = 'smem constant byte address 0x4 - core index']
  #allocation1 [shape = 'u32[144,128]{1,0:T(1,128)}', space=vmem, size = 0x12000, scoped, tag = 'internal scratch']
  %s0 = inlined_call_operand.vmem [shape: s32[32,1], index: 0, kind: input, shape index: {}]
  %s1 = inlined_call_operand.vmem [shape: f32[128,32], index: 1, kind: input, shape index: {}]
  %s2 = inlined_call_operand.vmem [shape: f32[32,32], index: 2, kind: input, shape index: {}]
  %s3 = inlined_call_operand.vmem [shape: f32[32,4], index: 3, kind: input, shape index: {}]
  %s4 = inlined_call_operand.vmem [shape: f32[4,32], index: 4, kind: input, shape index: {}]
  %s5 = inlined_call_operand.vmem [shape: f32[32,96], index: 5, kind: input, shape index: {}]
  %s6 = inlined_call_operand.vmem [shape: f32[1,96], index: 6, kind: input, shape index: {}]
  %s7 = inlined_call_operand.vmem [shape: f32[32,32], index: 7, kind: input, shape index: {}]
  %s8 = inlined_call_operand.vmem [shape: f32[1,32], index: 8, kind: input, shape index: {}]
  %s9 = inlined_call_operand.vmem [shape: f32[1,32], index: 9, kind: input, shape index: {}]
  %s10 = inlined_call_operand.vmem [shape: f32[1,32], index: 10, kind: input, shape index: {}]
  %s11 = inlined_call_operand.vmem [shape: f32[1,32], index: 11, kind: input, shape index: {}]
  %s12 = inlined_call_operand.vmem [shape: f32[1,32], index: 12, kind: input, shape index: {}]
  %s13 = inlined_call_operand.vmem [shape: f32[32,64], index: 13, kind: input, shape index: {}]
  %s14 = inlined_call_operand.vmem [shape: f32[1,64], index: 14, kind: input, shape index: {}]
  %s15 = inlined_call_operand.vmem [shape: f32[64,32], index: 15, kind: input, shape index: {}]
  %s16 = inlined_call_operand.vmem [shape: f32[1,32], index: 16, kind: input, shape index: {}]
  %s17 = inlined_call_operand.vmem [shape: f32[32,128], index: 17, kind: input, shape index: {}]
  %s18 = inlined_call_operand.vmem [shape: f32[1,128], index: 18, kind: input, shape index: {}]
  %s19 = inlined_call_operand.vmem [shape: f32[32,128], index: 19, kind: output, shape index: {}]
  %s20 = sld [smem:[#allocation0]]
  $region86: #{model_forward.1} parent=0
    _
  %s22 = ssub.s32 1, %s20
  %s23 = scalar_select 0, %s22, %s20
  // Predicated region
  $region2: #{model_forward.1} parent=0 // pred_check
    _
  $region3: #{model_forward.1} parent=0 // pred_check_branch
    %25 = sbr.rel (0) target = $region5
  $region4: #{model_forward.1} parent=0 // pred_region
    _
  $region5: #{model_forward.1} parent=0 // pred_fallthru
    _
  // Predicated region
  $region6: #{model_forward.1} parent=0 // pred_check
    _
  $region7: #{model_forward.1} parent=0 // pred_check_branch
    %27 = sbr.rel (0) target = $region9
  $region8: #{model_forward.1} parent=0 // pred_region
    _
  $region9: #{model_forward.1} parent=0 // pred_fallthru
    _
  // Predicated region
  $region10: #{model_forward.1} parent=0 // pred_check
    _
  $region11: #{model_forward.1} parent=0 // pred_check_branch
    %29 = sbr.rel (0) target = $region13
  $region12: #{model_forward.1} parent=0 // pred_region
    _
  $region13: #{model_forward.1} parent=0 // pred_fallthru
    _
  // Predicated region
  $region14: #{model_forward.1} parent=0 // pred_check
    _
  $region15: #{model_forward.1} parent=0 // pred_check_branch
    %31 = sbr.rel (0) target = $region17
  $region16: #{model_forward.1} parent=0 // pred_region
    _
  $region17: #{model_forward.1} parent=0 // pred_fallthru
    _
  // Predicated region
  $region18: #{model_forward.1} parent=0 // pred_check
    _
  $region19: #{model_forward.1} parent=0 // pred_check_branch
    %33 = sbr.rel (0) target = $region21
  $region20: #{model_forward.1} parent=0 // pred_region
    _
  $region21: #{model_forward.1} parent=0 // pred_fallthru
    _
  // Predicated region
  $region22: #{model_forward.1} parent=0 // pred_check
    _
  $region23: #{model_forward.1} parent=0 // pred_check_branch
    %35 = sbr.rel (0) target = $region25
  $region24: #{model_forward.1} parent=0 // pred_region
    _
  $region25: #{model_forward.1} parent=0 // pred_fallthru
    _
  // Predicated region
  $region26: #{model_forward.1} parent=0 // pred_check
    _
  $region27: #{model_forward.1} parent=0 // pred_check_branch
    %37 = sbr.rel (0) target = $region29
  $region28: #{model_forward.1} parent=0 // pred_region
    _
  $region29: #{model_forward.1} parent=0 // pred_fallthru
    _
  // Predicated region
  $region30: #{model_forward.1} parent=0 // pred_check
    _
  $region31: #{model_forward.1} parent=0 // pred_check_branch
    %39 = sbr.rel (0) target = $region33
  $region32: #{model_forward.1} parent=0 // pred_region
    _
  $region33: #{model_forward.1} parent=0 // pred_fallthru
    _
  // Predicated region
  $region34: #{model_forward.1} parent=0 // pred_check
    _
  $region35: #{model_forward.1} parent=0 // pred_check_branch
    %41 = sbr.rel (0) target = $region37
  $region36: #{model_forward.1} parent=0 // pred_region
    _
  $region37: #{model_forward.1} parent=0 // pred_fallthru
    _
  // Predicated region
  $region38: #{model_forward.1} parent=0 // pred_check
    _
  $region39: #{model_forward.1} parent=0 // pred_check_branch
    %43 = sbr.rel (0) target = $region41
  $region40: #{model_forward.1} parent=0 // pred_region
    _
  $region41: #{model_forward.1} parent=0 // pred_fallthru
    _
  // Predicated region
  $region42: #{model_forward.1} parent=0 // pred_check
    _
  $region43: #{model_forward.1} parent=0 // pred_check_branch
    %45 = sbr.rel (0) target = $region45
  $region44: #{model_forward.1} parent=0 // pred_region
    _
  $region45: #{model_forward.1} parent=0 // pred_fallthru
    _
  // Predicated region
  $region46: #{model_forward.1} parent=0 // pred_check
    _
  $region47: #{model_forward.1} parent=0 // pred_check_branch
    %47 = sbr.rel (0) target = $region49
  $region48: #{model_forward.1} parent=0 // pred_region
    _
  $region49: #{model_forward.1} parent=0 // pred_fallthru
    _
  // Predicated region
  $region50: #{model_forward.1} parent=0 // pred_check
    _
  $region51: #{model_forward.1} parent=0 // pred_check_branch
    %49 = sbr.rel (0) target = $region53
  $region52: #{model_forward.1} parent=0 // pred_region
    _
  $region53: #{model_forward.1} parent=0 // pred_fallthru
    _
  // Predicated region
  $region54: #{model_forward.1} parent=0 // pred_check
    _
  $region55: #{model_forward.1} parent=0 // pred_check_branch
    %51 = sbr.rel (0) target = $region57
  $region56: #{model_forward.1} parent=0 // pred_region
    _
  $region57: #{model_forward.1} parent=0 // pred_fallthru
    _
  // Predicated region
  $region58: #{model_forward.1} parent=0 // pred_check
    _
  $region59: #{model_forward.1} parent=0 // pred_check_branch
    %53 = sbr.rel (0) target = $region61
  $region60: #{model_forward.1} parent=0 // pred_region
    _
  $region61: #{model_forward.1} parent=0 // pred_fallthru
    _
  // Predicated region
  $region62: #{model_forward.1} parent=0 // pred_check
    _
  $region63: #{model_forward.1} parent=0 // pred_check_branch
    %55 = sbr.rel (0) target = $region65
  $region64: #{model_forward.1} parent=0 // pred_region
    _
  $region65: #{model_forward.1} parent=0 // pred_fallthru
    _
  // Predicated region
  $region66: #{model_forward.1} parent=0 // pred_check
    _
  $region67: #{model_forward.1} parent=0 // pred_check_branch
    %57 = sbr.rel (0) target = $region69
  $region68: #{model_forward.1} parent=0 // pred_region
    _
  $region69: #{model_forward.1} parent=0 // pred_fallthru
    _
  // Predicated region
  $region70: #{model_forward.1} parent=0 // pred_check
    _
  $region71: #{model_forward.1} parent=0 // pred_check_branch
    %59 = sbr.rel (0) target = $region73
  $region72: #{model_forward.1} parent=0 // pred_region
    _
  $region73: #{model_forward.1} parent=0 // pred_fallthru
    _
  // Predicated region
  $region74: #{model_forward.1} parent=0 // pred_check
    _
  $region75: #{model_forward.1} parent=0 // pred_check_branch
    %61 = sbr.rel (0) target = $region77
  $region76: #{model_forward.1} parent=0 // pred_region
    _
  $region77: #{model_forward.1} parent=0 // pred_fallthru
    _
  %v62 = vlaneseq
  %v63 = vand.u32 %v62, 127
  %v64 = vld [vmem:[%s0] sm:$0xff]
  %v65 = vld [vmem:[%s0 + $0x8] sm:$0xff]
  %v66 = vld [vmem:[%s0 + $0x10] sm:$0xff]
  %v67 = vld [vmem:[%s0 + $0x18] sm:$0xff]
  %68 = vset.pattern.permute.xlu0 0
  %69 = vperm.xlu0 %68, %v64
  %v70 = vpop.permute.xlu0 %69
  %71 = vset.pattern.permute.xlu0 0
  %72 = vperm.xlu0 %71, %v65
  %v73 = vpop.permute.xlu0 %72
  %74 = vset.pattern.permute.xlu0 0
  %75 = vperm.xlu0 %74, %v66
  %v76 = vpop.permute.xlu0 %75
  %77 = vset.pattern.permute.xlu0 0
  %78 = vperm.xlu0 %77, %v67
  %v79 = vpop.permute.xlu0 %78
  %vm80 = vcmp.eq.s32.totalorder %v63, %v70
  %vm81 = vcmp.eq.s32.totalorder %v63, %v73
  %vm82 = vcmp.eq.s32.totalorder %v63, %v76
  %vm83 = vcmp.eq.s32.totalorder %v63, %v79
  %v84 = vsel %vm80, 1, 0
  %v85 = vsel %vm81, 1, 0
  %v86 = vsel %vm82, 1, 0
  %v87 = vsel %vm83, 1, 0
  %v88 = vcvt.s32.f32 %v84
  %v89 = vcvt.s32.f32 %v85
  %v90 = vcvt.s32.f32 %v86
  %v91 = vcvt.s32.f32 %v87
  %v92 = vld [vmem:[%s1] sm:$0xff]
  %v93 = vld [vmem:[%s1 + $0x8] sm:$0xff]
  %v94 = vld [vmem:[%s1 + $0x10] sm:$0xff]
  %v95 = vld [vmem:[%s1 + $0x18] sm:$0xff]
  %v96 = vld [vmem:[%s1 + $0x20] sm:$0xff]
  %v97 = vld [vmem:[%s1 + $0x28] sm:$0xff]
  %v98 = vld [vmem:[%s1 + $0x30] sm:$0xff]
  %v99 = vld [vmem:[%s1 + $0x38] sm:$0xff]
  %v100 = vld [vmem:[%s1 + $0x40] sm:$0xff]
  %v101 = vld [vmem:[%s1 + $0x48] sm:$0xff]
  %v102 = vld [vmem:[%s1 + $0x50] sm:$0xff]
  %v103 = vld [vmem:[%s1 + $0x58] sm:$0xff]
  %v104 = vld [vmem:[%s1 + $0x60] sm:$0xff]
  %v105 = vld [vmem:[%s1 + $0x68] sm:$0xff]
  %v106 = vld [vmem:[%s1 + $0x70] sm:$0xff]
  %v107 = vld [vmem:[%s1 + $0x78] sm:$0xff]
  %v108 = vld [vmem:[%s2] sm:$0xff]
  %v109 = vld [vmem:[%s2 + $0x8] sm:$0xff]
  %v110 = vld [vmem:[%s2 + $0x10] sm:$0xff]
  %v111 = vld [vmem:[%s2 + $0x18] sm:$0xff]
  %112 = vmatprep.subr.mxu0 0.0
  %113 = vmatpush1.msra.mxu0 %v92
  %114 = vmatprep.subr.mxu0 0.0
  %115 = vmatpush1.msra.mxu0 %v93
  %116 = vmatprep.subr.mxu0 0.0
  %117 = vmatpush1.msra.mxu0 %v94
  %118 = vmatprep.subr.mxu0 0.0
  %119 = vmatpush1.msra.mxu0 %v95
  %120 = vmatprep.subr.mxu0 0.0
  %121 = vmatpush1.msra.mxu0 %v96
  %122 = vmatprep.subr.mxu0 0.0
  %123 = vmatpush1.msra.mxu0 %v97
  %124 = vmatprep.subr.mxu0 0.0
  %125 = vmatpush1.msra.mxu0 %v98
  %126 = vmatprep.subr.mxu0 0.0
  %127 = vmatpush1.msra.mxu0 %v99
  %128 = vmatprep.subr.mxu0 0.0
  %129 = vmatpush1.msra.mxu0 %v100
  %130 = vmatprep.subr.mxu0 0.0
  %131 = vmatpush1.msra.mxu0 %v101
  %132 = vmatprep.subr.mxu0 0.0
  %133 = vmatpush1.msra.mxu0 %v102
  %134 = vmatprep.subr.mxu0 0.0
  %135 = vmatpush1.msra.mxu0 %v103
  %136 = vmatprep.subr.mxu0 0.0
  %137 = vmatpush1.msra.mxu0 %v104
  %138 = vmatprep.subr.mxu0 0.0
  %139 = vmatpush1.msra.mxu0 %v105
  %140 = vmatprep.subr.mxu0 0.0
  %141 = vmatpush1.msra.mxu0 %v106
  %142 = vmatprep.subr.mxu0 0.0
  %143 = vmatpush1.msra.mxu0 %v107
  %144 = vmatprep.subr.mxu0 0.0
  %145 = vmatpush1.msra.mxu0 0.0
  %146 = vmatprep.subr.mxu0 0.0
  %147 = vmatpush1.msra.mxu0 0.0
  %148 = vmatprep.subr.mxu0 0.0
  %149 = vmatpush1.msra.mxu0 0.0
  %150 = vmatprep.subr.mxu0 0.0
  %151 = vmatpush1.msra.mxu0 0.0
  %152 = vmatprep.subr.mxu0 0.0
  %153 = vmatpush1.msra.mxu0 0.0
  %154 = vmatprep.subr.mxu0 0.0
  %155 = vmatpush1.msra.mxu0 0.0
  %156 = vmatprep.subr.mxu0 0.0
  %157 = vmatpush1.msra.mxu0 0.0
  %158 = vmatprep.subr.mxu0 0.0
  %159 = vmatpush1.msra.mxu0 0.0
  %160 = vmatprep.subr.mxu0 0.0
  %161 = vmatpush1.msra.mxu0 0.0
  %162 = vmatprep.subr.mxu0 0.0
  %163 = vmatpush1.msra.mxu0 0.0
  %164 = vmatprep.subr.mxu0 0.0
  %165 = vmatpush1.msra.mxu0 0.0
  %166 = vmatprep.subr.mxu0 0.0
  %167 = vmatpush1.msra.mxu0 0.0
  %168 = vmatprep.subr.mxu0 0.0
  %169 = vmatpush1.msra.mxu0 0.0
  %170 = vmatprep.subr.mxu0 0.0
  %171 = vmatpush1.msra.mxu0 0.0
  %172 = vmatprep.subr.mxu0 0.0
  %173 = vmatpush1.msra.mxu0 0.0
  %174 = vmatprep.subr.mxu0 0.0
  %175 = vmatpush1.msra.mxu0 0.0
  %176 = vmatprep.mubr.f32.mxu0 0.0
  %177 = vmatmul.mubr.f32.gmra.mrb[0].mxu0 %v88
  %v178 = vpop.f32.mrb[0].mxu0
  %v179 = vadd.f32 %v108, %v178
  %v180 = vpop.f32.mrb[0].mxu0
  %181 = vmatprep.mubr.f32.mxu0 0.0
  %182 = vmatmul.mubr.f32.gmra.mrb[0].mxu0 %v89
  %v183 = vpop.f32.mrb[0].mxu0
  %v184 = vadd.f32 %v109, %v183
  %v185 = vpop.f32.mrb[0].mxu0
  %186 = vmatprep.mubr.f32.mxu0 0.0
  %187 = vmatmul.mubr.f32.gmra.mrb[0].mxu0 %v90
  %v188 = vpop.f32.mrb[0].mxu0
  %v189 = vadd.f32 %v110, %v188
  %v190 = vpop.f32.mrb[0].mxu0
  %191 = vmatprep.mubr.f32.mxu0 0.0
  %192 = vmatmul.mubr.f32.gmra.mrb[0].mxu0 %v91
  %v193 = vpop.f32.mrb[0].mxu0
  %v194 = vadd.f32 %v111, %v193
  %v195 = vpop.f32.mrb[0].mxu0
  %196 = vdwg.mxu0
  %v197 = vld [vmem:[%s9] sm:$0x1]
  %v198 = vld [vmem:[%s10] sm:$0x1]
  %vm199 = vcmask 261120
  %v200 = vsel %vm199, %v179, 0.0
  %201 = vadd.xlane.f32.xlu0 %v200
  %v202 = vpop.xlane.xlu0 %201
  %v203 = vsel %vm199, %v184, 0.0
  %204 = vadd.xlane.f32.xlu0 %v203
  %v205 = vpop.xlane.xlu0 %204
  %v206 = vsel %vm199, %v189, 0.0
  %207 = vadd.xlane.f32.xlu0 %v206
  %v208 = vpop.xlane.xlu0 %207
  %v209 = vsel %vm199, %v194, 0.0
  %210 = vadd.xlane.f32.xlu0 %v209
  %v211 = vpop.xlane.xlu0 %210
  %v212 = vrcp.pop 32.0
  %v213 = vmul.f32 %v202, %v212
  %v214 = vmul.f32 %v205, %v212
  %v215 = vmul.f32 %v208, %v212
  %v216 = vmul.f32 %v211, %v212
  %v217 = vsub.f32 %v179, %v213
  %v218 = vsub.f32 %v184, %v214
  %v219 = vsub.f32 %v189, %v215
  %v220 = vsub.f32 %v194, %v216
  %v221 = vmul.f32 %v217, %v217
  %v222 = vmul.f32 %v218, %v218
  %v223 = vmul.f32 %v219, %v219
  %v224 = vmul.f32 %v220, %v220
  %v225 = vsel %vm199, %v221, 0.0
  %226 = vadd.xlane.f32.xlu0 %v225
  %v227 = vpop.xlane.xlu0 %226
  %v228 = vsel %vm199, %v222, 0.0
  %229 = vadd.xlane.f32.xlu0 %v228
  %v230 = vpop.xlane.xlu0 %229
  %v231 = vsel %vm199, %v223, 0.0
  %232 = vadd.xlane.f32.xlu0 %v231
  %v233 = vpop.xlane.xlu0 %232
  %v234 = vsel %vm199, %v224, 0.0
  %235 = vadd.xlane.f32.xlu0 %v234
  %v236 = vpop.xlane.xlu0 %235
  %v237 = vmul.f32 %v227, %v212
  %v238 = vmul.f32 %v230, %v212
  %v239 = vmul.f32 %v233, %v212
  %v240 = vmul.f32 %v236, %v212
  %v241 = vadd.f32 %v237, 1e-05
  %v242 = vadd.f32 %v238, 1e-05
  %v243 = vadd.f32 %v239, 1e-05
  %v244 = vadd.f32 %v240, 1e-05
  %v245 = vrsqrt.pop %v241
  %v246 = vrsqrt.pop %v242
  %v247 = vrsqrt.pop %v243
  %v248 = vrsqrt.pop %v244
  %v249 = vmul.f32 %v217, %v245
  %v250 = vmul.f32 %v218, %v246
  %v251 = vmul.f32 %v219, %v247
  %v252 = vmul.f32 %v220, %v248
  %v254 = vlaneseq
  %v255 = vshrl.u32 %v254, 7
  %v256 = vsub.s32 0, %v255
  %v257 = vrot.slane %v197, %v256
  %v259 = vmul.f32 %v249, %v257
  %v260 = vmul.f32 %v250, %v257
  %v261 = vmul.f32 %v251, %v257
  %v262 = vmul.f32 %v252, %v257
  %v264 = vlaneseq
  %v265 = vshrl.u32 %v264, 7
  %v266 = vsub.s32 0, %v265
  %v267 = vrot.slane %v198, %v266
  %v269 = vadd.f32 %v259, %v267
  %v270 = vadd.f32 %v260, %v267
  %v271 = vadd.f32 %v261, %v267
  %v272 = vadd.f32 %v262, %v267
  %v273 = vld [vmem:[%s5] sm:$0xff]
  %v274 = vld [vmem:[%s5 + $0x8] sm:$0xff]
  %v275 = vld [vmem:[%s5 + $0x10] sm:$0xff]
  %v276 = vld [vmem:[%s5 + $0x18] sm:$0xff]
  %v277 = vld [vmem:[%s6] sm:$0x1]
  %v279 = vlaneseq
  %v280 = vshrl.u32 %v279, 7
  %v281 = vsub.s32 0, %v280
  %v282 = vrot.slane %v277, %v281
  %v285 = vsel %vm199, %v269, 0
  %v288 = vsel %vm199, %v270, 0
  %v291 = vsel %vm199, %v271, 0
  %v294 = vsel %vm199, %v272, 0
  %296 = vmatprep.subr.mxu0 0.0
  %297 = vmatpush1.msra.mxu0 %v273
  %298 = vmatprep.subr.mxu0 0.0
  %299 = vmatpush1.msra.mxu0 %v274
  %300 = vmatprep.subr.mxu0 0.0
  %301 = vmatpush1.msra.mxu0 %v275
  %302 = vmatprep.subr.mxu0 0.0
  %303 = vmatpush1.msra.mxu0 %v276
  %304 = vmatprep.subr.mxu0 0.0
  %305 = vmatpush1.msra.mxu0 0.0
  %306 = vmatprep.subr.mxu0 0.0
  %307 = vmatpush1.msra.mxu0 0.0
  %308 = vmatprep.subr.mxu0 0.0
  %309 = vmatpush1.msra.mxu0 0.0
  %310 = vmatprep.subr.mxu0 0.0
  %311 = vmatpush1.msra.mxu0 0.0
  %312 = vmatprep.subr.mxu0 0.0
  %313 = vmatpush1.msra.mxu0 0.0
  %314 = vmatprep.subr.mxu0 0.0
  %315 = vmatpush1.msra.mxu0 0.0
  %316 = vmatprep.subr.mxu0 0.0
  %317 = vmatpush1.msra.mxu0 0.0
  %318 = vmatprep.subr.mxu0 0.0
  %319 = vmatpush1.msra.mxu0 0.0
  %320 = vmatprep.subr.mxu0 0.0
  %321 = vmatpush1.msra.mxu0 0.0
  %322 = vmatprep.subr.mxu0 0.0
  %323 = vmatpush1.msra.mxu0 0.0
  %324 = vmatprep.subr.mxu0 0.0
  %325 = vmatpush1.msra.mxu0 0.0
  %326 = vmatprep.subr.mxu0 0.0
  %327 = vmatpush1.msra.mxu0 0.0
  %328 = vmatprep.subr.mxu0 0.0
  %329 = vmatpush1.msra.mxu0 0.0
  %330 = vmatprep.subr.mxu0 0.0
  %331 = vmatpush1.msra.mxu0 0.0
  %332 = vmatprep.subr.mxu0 0.0
  %333 = vmatpush1.msra.mxu0 0.0
  %334 = vmatprep.subr.mxu0 0.0
  %335 = vmatpush1.msra.mxu0 0.0
  %336 = vmatprep.subr.mxu0 0.0
  %337 = vmatpush1.msra.mxu0 0.0
  %338 = vmatprep.subr.mxu0 0.0
  %339 = vmatpush1.msra.mxu0 0.0
  %340 = vmatprep.subr.mxu0 0.0
  %341 = vmatpush1.msra.mxu0 0.0
  %342 = vmatprep.subr.mxu0 0.0
  %343 = vmatpush1.msra.mxu0 0.0
  %344 = vmatprep.subr.mxu0 0.0
  %345 = vmatpush1.msra.mxu0 0.0
  %346 = vmatprep.subr.mxu0 0.0
  %347 = vmatpush1.msra.mxu0 0.0
  %348 = vmatprep.subr.mxu0 0.0
  %349 = vmatpush1.msra.mxu0 0.0
  %350 = vmatprep.subr.mxu0 0.0
  %351 = vmatpush1.msra.mxu0 0.0
  %352 = vmatprep.subr.mxu0 0.0
  %353 = vmatpush1.msra.mxu0 0.0
  %354 = vmatprep.subr.mxu0 0.0
  %355 = vmatpush1.msra.mxu0 0.0
  %356 = vmatprep.subr.mxu0 0.0
  %357 = vmatpush1.msra.mxu0 0.0
  %358 = vmatprep.subr.mxu0 0.0
  %359 = vmatpush1.msra.mxu0 0.0
  %360 = vmatprep.mubr.f32.mxu0 0.0
  %361 = vmatmul.mubr.f32.gmra.mrb[0].mxu0 %v285
  %v362 = vpop.f32.mrb[0].mxu0
  %v363 = vadd.f32 %v282, %v362
  %v364 = vpop.f32.mrb[0].mxu0
  %365 = vmatprep.mubr.f32.mxu0 0.0
  %366 = vmatmul.mubr.f32.gmra.mrb[0].mxu0 %v288
  %v367 = vpop.f32.mrb[0].mxu0
  %v368 = vadd.f32 %v282, %v367
  %v369 = vpop.f32.mrb[0].mxu0
  %370 = vmatprep.mubr.f32.mxu0 0.0
  %371 = vmatmul.mubr.f32.gmra.mrb[0].mxu0 %v291
  %v372 = vpop.f32.mrb[0].mxu0
  %v373 = vadd.f32 %v282, %v372
  %v374 = vpop.f32.mrb[0].mxu0
  %375 = vmatprep.mubr.f32.mxu0 0.0
  %376 = vmatmul.mubr.f32.gmra.mrb[0].mxu0 %v294
  %v377 = vpop.f32.mrb[0].mxu0
  %v378 = vadd.f32 %v282, %v377
  %v379 = vpop.f32.mrb[0].mxu0
  %380 = vdwg.mxu0
  %385 = vrot.lane.b32.xlu0 %v363, 96
  %v386 = vpop.permute.xlu0 %385
  %387 = vrot.lane.b32.xlu0 %v368, 96
  %v388 = vpop.permute.xlu0 %387
  %389 = vrot.lane.b32.xlu0 %v373, 96
  %v390 = vpop.permute.xlu0 %389
  %391 = vrot.lane.b32.xlu0 %v378, 96
  %v392 = vpop.permute.xlu0 %391
  %397 = vrot.lane.b32.xlu0 %v363, 64
  %v398 = vpop.permute.xlu0 %397
  %399 = vrot.lane.b32.xlu0 %v368, 64
  %v400 = vpop.permute.xlu0 %399
  %401 = vrot.lane.b32.xlu0 %v373, 64
  %v402 = vpop.permute.xlu0 %401
  %403 = vrot.lane.b32.xlu0 %v378, 64
  %v404 = vpop.permute.xlu0 %403
  %v409 = vld [vmem:[%s3] sm:$0xff]
  %v410 = vld [vmem:[%s3 + $0x8] sm:$0xff]
  %v411 = vld [vmem:[%s3 + $0x10] sm:$0xff]
  %v412 = vld [vmem:[%s3 + $0x18] sm:$0xff]
  %v413 = vmul.f32 %v363, %v386
  %v414 = vmul.f32 %v368, %v388
  %v415 = vmul.f32 %v373, %v390
  %v416 = vmul.f32 %v378, %v392
  %v418 = vsel %vm199, %v413, 0
  %v421 = vsel %vm199, %v414, 0
  %v424 = vsel %vm199, %v415, 0
  %v427 = vsel %vm199, %v416, 0
  %429 = vmatprep.subr.mxu0 0.0
  %430 = vmatpush1.msra.mxu0 %v409
  %431 = vmatprep.subr.mxu0 0.0
  %432 = vmatpush1.msra.mxu0 %v410
  %433 = vmatprep.subr.mxu0 0.0
  %434 = vmatpush1.msra.mxu0 %v411
  %435 = vmatprep.subr.mxu0 0.0
  %436 = vmatpush1.msra.mxu0 %v412
  %437 = vmatprep.subr.mxu0 0.0
  %438 = vmatpush1.msra.mxu0 0.0
  %439 = vmatprep.subr.mxu0 0.0
  %440 = vmatpush1.msra.mxu0 0.0
  %441 = vmatprep.subr.mxu0 0.0
  %442 = vmatpush1.msra.mxu0 0.0
  %443 = vmatprep.subr.mxu0 0.0
  %444 = vmatpush1.msra.mxu0 0.0
  %445 = vmatprep.subr.mxu0 0.0
  %446 = vmatpush1.msra.mxu0 0.0
  %447 = vmatprep.subr.mxu0 0.0
  %448 = vmatpush1.msra.mxu0 0.0
  %449 = vmatprep.subr.mxu0 0.0
  %450 = vmatpush1.msra.mxu0 0.0
  %451 = vmatprep.subr.mxu0 0.0
  %452 = vmatpush1.msra.mxu0 0.0
  %453 = vmatprep.subr.mxu0 0.0
  %454 = vmatpush1.msra.mxu0 0.0
  %455 = vmatprep.subr.mxu0 0.0
  %456 = vmatpush1.msra.mxu0 0.0
  %457 = vmatprep.subr.mxu0 0.0
  %458 = vmatpush1.msra.mxu0 0.0
  %459 = vmatprep.subr.mxu0 0.0
  %460 = vmatpush1.msra.mxu0 0.0
  %461 = vmatprep.subr.mxu0 0.0
  %462 = vmatpush1.msra.mxu0 0.0
  %463 = vmatprep.subr.mxu0 0.0
  %464 = vmatpush1.msra.mxu0 0.0
  %465 = vmatprep.subr.mxu0 0.0
  %466 = vmatpush1.msra.mxu0 0.0
  %467 = vmatprep.subr.mxu0 0.0
  %468 = vmatpush1.msra.mxu0 0.0
  %469 = vmatprep.subr.mxu0 0.0
  %470 = vmatpush1.msra.mxu0 0.0
  %471 = vmatprep.subr.mxu0 0.0
  %472 = vmatpush1.msra.mxu0 0.0
  %473 = vmatprep.subr.mxu0 0.0
  %474 = vmatpush1.msra.mxu0 0.0
  %475 = vmatprep.subr.mxu0 0.0
  %476 = vmatpush1.msra.mxu0 0.0
  %477 = vmatprep.subr.mxu0 0.0
  %478 = vmatpush1.msra.mxu0 0.0
  %479 = vmatprep.subr.mxu0 0.0
  %480 = vmatpush1.msra.mxu0 0.0
  %481 = vmatprep.subr.mxu0 0.0
  %482 = vmatpush1.msra.mxu0 0.0
  %483 = vmatprep.subr.mxu0 0.0
  %484 = vmatpush1.msra.mxu0 0.0
  %485 = vmatprep.subr.mxu0 0.0
  %486 = vmatpush1.msra.mxu0 0.0
  %487 = vmatprep.subr.mxu0 0.0
  %488 = vmatpush1.msra.mxu0 0.0
  %489 = vmatprep.subr.mxu0 0.0
  %490 = vmatpush1.msra.mxu0 0.0
  %491 = vmatprep.subr.mxu0 0.0
  %492 = vmatpush1.msra.mxu0 0.0
  %493 = vmatprep.mubr.f32.mxu0 0.0
  %494 = vmatmul.mubr.f32.gmra.mrb[0].mxu0 %v418
  %v495 = vpop.f32.mrb[0].mxu0
  %v496 = vadd.f32 0.0, %v495
  %v497 = vpop.f32.mrb[0].mxu0
  %498 = vmatprep.mubr.f32.mxu0 0.0
  %499 = vmatmul.mubr.f32.gmra.mrb[0].mxu0 %v421
  %v500 = vpop.f32.mrb[0].mxu0
  %v501 = vadd.f32 0.0, %v500
  %v502 = vpop.f32.mrb[0].mxu0
  %503 = vmatprep.mubr.f32.mxu0 0.0
  %504 = vmatmul.mubr.f32.gmra.mrb[0].mxu0 %v424
  %v505 = vpop.f32.mrb[0].mxu0
  %v506 = vadd.f32 0.0, %v505
  %v507 = vpop.f32.mrb[0].mxu0
  %508 = vmatprep.mubr.f32.mxu0 0.0
  %509 = vmatmul.mubr.f32.gmra.mrb[0].mxu0 %v427
  %v510 = vpop.f32.mrb[0].mxu0
  %v511 = vadd.f32 0.0, %v510
  %v512 = vpop.f32.mrb[0].mxu0
  %513 = vdwg.mxu0
  %v514 = vmul.f32 %v496, 0.35355338
  %v515 = vmul.f32 %v501, 0.35355338
  %v516 = vmul.f32 %v506, 0.35355338
  %v517 = vmul.f32 %v511, 0.35355338
  %v518 = vmul.f32 %v363, %v390
  %v519 = vmul.f32 %v368, %v392
  %v520 = vmul.f32 %v373, %v386
  %v521 = vmul.f32 %v378, %v388
  %v523 = vsel %vm199, %v518, 0
  %v526 = vsel %vm199, %v519, 0
  %v529 = vsel %vm199, %v520, 0
  %v532 = vsel %vm199, %v521, 0
  %534 = vmatprep.subr.mxu0 0.0
  %535 = vmatpush1.msra.mxu0 %v409
  %536 = vmatprep.subr.mxu0 0.0
  %537 = vmatpush1.msra.mxu0 %v410
  %538 = vmatprep.subr.mxu0 0.0
  %539 = vmatpush1.msra.mxu0 %v411
  %540 = vmatprep.subr.mxu0 0.0
  %541 = vmatpush1.msra.mxu0 %v412
  %542 = vmatprep.subr.mxu0 0.0
  %543 = vmatpush1.msra.mxu0 0.0
  %544 = vmatprep.subr.mxu0 0.0
  %545 = vmatpush1.msra.mxu0 0.0
  %546 = vmatprep.subr.mxu0 0.0
  %547 = vmatpush1.msra.mxu0 0.0
  %548 = vmatprep.subr.mxu0 0.0
  %549 = vmatpush1.msra.mxu0 0.0
  %550 = vmatprep.subr.mxu0 0.0
  %551 = vmatpush1.msra.mxu0 0.0
  %552 = vmatprep.subr.mxu0 0.0
  %553 = vmatpush1.msra.mxu0 0.0
  %554 = vmatprep.subr.mxu0 0.0
  %555 = vmatpush1.msra.mxu0 0.0
  %556 = vmatprep.subr.mxu0 0.0
  %557 = vmatpush1.msra.mxu0 0.0
  %558 = vmatprep.subr.mxu0 0.0
  %559 = vmatpush1.msra.mxu0 0.0
  %560 = vmatprep.subr.mxu0 0.0
  %561 = vmatpush1.msra.mxu0 0.0
  %562 = vmatprep.subr.mxu0 0.0
  %563 = vmatpush1.msra.mxu0 0.0
  %564 = vmatprep.subr.mxu0 0.0
  %565 = vmatpush1.msra.mxu0 0.0
  %566 = vmatprep.subr.mxu0 0.0
  %567 = vmatpush1.msra.mxu0 0.0
  %568 = vmatprep.subr.mxu0 0.0
  %569 = vmatpush1.msra.mxu0 0.0
  %570 = vmatprep.subr.mxu0 0.0
  %571 = vmatpush1.msra.mxu0 0.0
  %572 = vmatprep.subr.mxu0 0.0
  %573 = vmatpush1.msra.mxu0 0.0
  %574 = vmatprep.subr.mxu0 0.0
  %575 = vmatpush1.msra.mxu0 0.0
  %576 = vmatprep.subr.mxu0 0.0
  %577 = vmatpush1.msra.mxu0 0.0
  %578 = vmatprep.subr.mxu0 0.0
  %579 = vmatpush1.msra.mxu0 0.0
  %580 = vmatprep.subr.mxu0 0.0
  %581 = vmatpush1.msra.mxu0 0.0
  %582 = vmatprep.subr.mxu0 0.0
  %583 = vmatpush1.msra.mxu0 0.0
  %584 = vmatprep.subr.mxu0 0.0
  %585 = vmatpush1.msra.mxu0 0.0
  %586 = vmatprep.subr.mxu0 0.0
  %587 = vmatpush1.msra.mxu0 0.0
  %588 = vmatprep.subr.mxu0 0.0
  %589 = vmatpush1.msra.mxu0 0.0
  %590 = vmatprep.subr.mxu0 0.0
  %591 = vmatpush1.msra.mxu0 0.0
  %592 = vmatprep.subr.mxu0 0.0
  %593 = vmatpush1.msra.mxu0 0.0
  %594 = vmatprep.subr.mxu0 0.0
  %595 = vmatpush1.msra.mxu0 0.0
  %596 = vmatprep.subr.mxu0 0.0
  %597 = vmatpush1.msra.mxu0 0.0
  %598 = vmatprep.mubr.f32.mxu0 0.0
  %599 = vmatmul.mubr.f32.gmra.mrb[0].mxu0 %v523
  %v600 = vpop.f32.mrb[0].mxu0
  %v601 = vadd.f32 0.0, %v600
  %v602 = vpop.f32.mrb[0].mxu0
  %603 = vmatprep.mubr.f32.mxu0 0.0
  %604 = vmatmul.mubr.f32.gmra.mrb[0].mxu0 %v526
  %v605 = vpop.f32.mrb[0].mxu0
  %v606 = vadd.f32 0.0, %v605
  %v607 = vpop.f32.mrb[0].mxu0
  %608 = vmatprep.mubr.f32.mxu0 0.0
  %609 = vmatmul.mubr.f32.gmra.mrb[0].mxu0 %v529
  %v610 = vpop.f32.mrb[0].mxu0
  %v611 = vadd.f32 0.0, %v610
  %v612 = vpop.f32.mrb[0].mxu0
  %613 = vmatprep.mubr.f32.mxu0 0.0
  %614 = vmatmul.mubr.f32.gmra.mrb[0].mxu0 %v532
  %v615 = vpop.f32.mrb[0].mxu0
  %v616 = vadd.f32 0.0, %v615
  %v617 = vpop.f32.mrb[0].mxu0
  %618 = vdwg.mxu0
  %v619 = vmul.f32 %v601, 0.35355338
  %v620 = vmul.f32 %v606, 0.35355338
  %v621 = vmul.f32 %v611, 0.35355338
  %v622 = vmul.f32 %v616, 0.35355338
  %v623 = vmax.f32 %v514, %v619
  %v624 = vmax.f32 %v515, %v620
  %v625 = vmax.f32 %v516, %v621
  %v626 = vmax.f32 %v517, %v622
  %v627 = vsub.f32 %v514, %v623
  %v628 = vsub.f32 %v515, %v624
  %v629 = vsub.f32 %v516, %v625
  %v630 = vsub.f32 %v517, %v626
  %v631 = vmul.f32 %v627, 1.442695
  %v632 = vpow.pop %v631
  %v633 = vmul.f32 %v628, 1.442695
  %v634 = vpow.pop %v633
  %v635 = vmul.f32 %v629, 1.442695
  %v636 = vpow.pop %v635
  %v637 = vmul.f32 %v630, 1.442695
  %v638 = vpow.pop %v637
  %v639 = vsub.f32 %v619, %v623
  %v640 = vsub.f32 %v620, %v624
  %v641 = vsub.f32 %v621, %v625
  %v642 = vsub.f32 %v622, %v626
  %v643 = vmul.f32 %v639, 1.442695
  %v644 = vpow.pop %v643
  %v645 = vmul.f32 %v640, 1.442695
  %v646 = vpow.pop %v645
  %v647 = vmul.f32 %v641, 1.442695
  %v648 = vpow.pop %v647
  %v649 = vmul.f32 %v642, 1.442695
  %v650 = vpow.pop %v649
  %v651 = vadd.f32 %v632, %v644
  %v652 = vadd.f32 %v634, %v646
  %v653 = vadd.f32 %v636, %v648
  %v654 = vadd.f32 %v638, %v650
  %v655 = vrcp.pop %v651
  %v656 = vrcp.pop %v652
  %v657 = vrcp.pop %v653
  %v658 = vrcp.pop %v654
  %v659 = vld [vmem:[%s4] sm:$0xf]
  %v660 = vmul.f32 %v632, %v655
  %v661 = vmul.f32 %v634, %v656
  %v662 = vmul.f32 %v636, %v657
  %v663 = vmul.f32 %v638, %v658
  %vm664 = vcmask 31744
  %v666 = vsel %vm664, %v660, 0
  %v669 = vsel %vm664, %v661, 0
  %v672 = vsel %vm664, %v662, 0
  %v675 = vsel %vm664, %v663, 0
  %vm677 = vcmask 1043456
  %v679 = vsel %vm677, %v659, 0
  %681 = vmatprep.subr.mxu0 0.0
  %682 = vmatpush1.msra.mxu0 %v679
  %683 = vmatprep.subr.mxu0 0.0
  %684 = vmatpush1.msra.mxu0 0.0
  %685 = vmatprep.subr.mxu0 0.0
  %686 = vmatpush1.msra.mxu0 0.0
  %687 = vmatprep.subr.mxu0 0.0
  %688 = vmatpush1.msra.mxu0 0.0
  %689 = vmatprep.subr.mxu0 0.0
  %690 = vmatpush1.msra.mxu0 0.0
  %691 = vmatprep.subr.mxu0 0.0
  %692 = vmatpush1.msra.mxu0 0.0
  %693 = vmatprep.subr.mxu0 0.0
  %694 = vmatpush1.msra.mxu0 0.0
  %695 = vmatprep.subr.mxu0 0.0
  %696 = vmatpush1.msra.mxu0 0.0
  %697 = vmatprep.subr.mxu0 0.0
  %698 = vmatpush1.msra.mxu0 0.0
  %699 = vmatprep.subr.mxu0 0.0
  %700 = vmatpush1.msra.mxu0 0.0
  %701 = vmatprep.subr.mxu0 0.0
  %702 = vmatpush1.msra.mxu0 0.0
  %703 = vmatprep.subr.mxu0 0.0
  %704 = vmatpush1.msra.mxu0 0.0
  %705 = vmatprep.subr.mxu0 0.0
  %706 = vmatpush1.msra.mxu0 0.0
  %707 = vmatprep.subr.mxu0 0.0
  %708 = vmatpush1.msra.mxu0 0.0
  %709 = vmatprep.subr.mxu0 0.0
  %710 = vmatpush1.msra.mxu0 0.0
  %711 = vmatprep.subr.mxu0 0.0
  %712 = vmatpush1.msra.mxu0 0.0
  %713 = vmatprep.subr.mxu0 0.0
  %714 = vmatpush1.msra.mxu0 0.0
  %715 = vmatprep.subr.mxu0 0.0
  %716 = vmatpush1.msra.mxu0 0.0
  %717 = vmatprep.subr.mxu0 0.0
  %718 = vmatpush1.msra.mxu0 0.0
  %719 = vmatprep.subr.mxu0 0.0
  %720 = vmatpush1.msra.mxu0 0.0
  %721 = vmatprep.subr.mxu0 0.0
  %722 = vmatpush1.msra.mxu0 0.0
  %723 = vmatprep.subr.mxu0 0.0
  %724 = vmatpush1.msra.mxu0 0.0
  %725 = vmatprep.subr.mxu0 0.0
  %726 = vmatpush1.msra.mxu0 0.0
  %727 = vmatprep.subr.mxu0 0.0
  %728 = vmatpush1.msra.mxu0 0.0
  %729 = vmatprep.subr.mxu0 0.0
  %730 = vmatpush1.msra.mxu0 0.0
  %731 = vmatprep.subr.mxu0 0.0
  %732 = vmatpush1.msra.mxu0 0.0
  %733 = vmatprep.subr.mxu0 0.0
  %734 = vmatpush1.msra.mxu0 0.0
  %735 = vmatprep.subr.mxu0 0.0
  %736 = vmatpush1.msra.mxu0 0.0
  %737 = vmatprep.subr.mxu0 0.0
  %738 = vmatpush1.msra.mxu0 0.0
  %739 = vmatprep.subr.mxu0 0.0
  %740 = vmatpush1.msra.mxu0 0.0
  %741 = vmatprep.subr.mxu0 0.0
  %742 = vmatpush1.msra.mxu0 0.0
  %743 = vmatprep.subr.mxu0 0.0
  %744 = vmatpush1.msra.mxu0 0.0
  %745 = vmatprep.mubr.f32.mxu0 0.0
  %746 = vmatmul.mubr.f32.gmra.mrb[0].mxu0 %v666
  %v747 = vpop.f32.mrb[0].mxu0
  %v748 = vadd.f32 0.0, %v747
  %v749 = vpop.f32.mrb[0].mxu0
  %750 = vmatprep.mubr.f32.mxu0 0.0
  %751 = vmatmul.mubr.f32.gmra.mrb[0].mxu0 %v669
  %v752 = vpop.f32.mrb[0].mxu0
  %v753 = vadd.f32 0.0, %v752
  %v754 = vpop.f32.mrb[0].mxu0
  %755 = vmatprep.mubr.f32.mxu0 0.0
  %756 = vmatmul.mubr.f32.gmra.mrb[0].mxu0 %v672
  %v757 = vpop.f32.mrb[0].mxu0
  %v758 = vadd.f32 0.0, %v757
  %v759 = vpop.f32.mrb[0].mxu0
  %760 = vmatprep.mubr.f32.mxu0 0.0
  %761 = vmatmul.mubr.f32.gmra.mrb[0].mxu0 %v675
  %v762 = vpop.f32.mrb[0].mxu0
  %v763 = vadd.f32 0.0, %v762
  %v764 = vpop.f32.mrb[0].mxu0
  %765 = vdwg.mxu0
  %v766 = vmul.f32 %v748, %v398
  %v767 = vmul.f32 %v753, %v400
  %v768 = vmul.f32 %v758, %v402
  %v769 = vmul.f32 %v763, %v404
  %v770 = vmul.f32 %v644, %v655
  %v771 = vmul.f32 %v646, %v656
  %v772 = vmul.f32 %v648, %v657
  %v773 = vmul.f32 %v650, %v658
  %v775 = vsel %vm664, %v770, 0
  %v778 = vsel %vm664, %v771, 0
  %v781 = vsel %vm664, %v772, 0
  %v784 = vsel %vm664, %v773, 0
  %786 = vmatprep.subr.mxu0 0.0
  %787 = vmatpush1.msra.mxu0 %v679
  %788 = vmatprep.subr.mxu0 0.0
  %789 = vmatpush1.msra.mxu0 0.0
  %790 = vmatprep.subr.mxu0 0.0
  %791 = vmatpush1.msra.mxu0 0.0
  %792 = vmatprep.subr.mxu0 0.0
  %793 = vmatpush1.msra.mxu0 0.0
  %794 = vmatprep.subr.mxu0 0.0
  %795 = vmatpush1.msra.mxu0 0.0
  %796 = vmatprep.subr.mxu0 0.0
  %797 = vmatpush1.msra.mxu0 0.0
  %798 = vmatprep.subr.mxu0 0.0
  %799 = vmatpush1.msra.mxu0 0.0
  %800 = vmatprep.subr.mxu0 0.0
  %801 = vmatpush1.msra.mxu0 0.0
  %802 = vmatprep.subr.mxu0 0.0
  %803 = vmatpush1.msra.mxu0 0.0
  %804 = vmatprep.subr.mxu0 0.0
  %805 = vmatpush1.msra.mxu0 0.0
  %806 = vmatprep.subr.mxu0 0.0
  %807 = vmatpush1.msra.mxu0 0.0
  %808 = vmatprep.subr.mxu0 0.0
  %809 = vmatpush1.msra.mxu0 0.0
  %810 = vmatprep.subr.mxu0 0.0
  %811 = vmatpush1.msra.mxu0 0.0
  %812 = vmatprep.subr.mxu0 0.0
  %813 = vmatpush1.msra.mxu0 0.0
  %814 = vmatprep.subr.mxu0 0.0
  %815 = vmatpush1.msra.mxu0 0.0
  %816 = vmatprep.subr.mxu0 0.0
  %817 = vmatpush1.msra.mxu0 0.0
  %818 = vmatprep.subr.mxu0 0.0
  %819 = vmatpush1.msra.mxu0 0.0
  %820 = vmatprep.subr.mxu0 0.0
  %821 = vmatpush1.msra.mxu0 0.0
  %822 = vmatprep.subr.mxu0 0.0
  %823 = vmatpush1.msra.mxu0 0.0
  %824 = vmatprep.subr.mxu0 0.0
  %825 = vmatpush1.msra.mxu0 0.0
  %826 = vmatprep.subr.mxu0 0.0
  %827 = vmatpush1.msra.mxu0 0.0
  %828 = vmatprep.subr.mxu0 0.0
  %829 = vmatpush1.msra.mxu0 0.0
  %830 = vmatprep.subr.mxu0 0.0
  %831 = vmatpush1.msra.mxu0 0.0
  %832 = vmatprep.subr.mxu0 0.0
  %833 = vmatpush1.msra.mxu0 0.0
  %834 = vmatprep.subr.mxu0 0.0
  %835 = vmatpush1.msra.mxu0 0.0
  %836 = vmatprep.subr.mxu0 0.0
  %837 = vmatpush1.msra.mxu0 0.0
  %838 = vmatprep.subr.mxu0 0.0
  %839 = vmatpush1.msra.mxu0 0.0
  %840 = vmatprep.subr.mxu0 0.0
  %841 = vmatpush1.msra.mxu0 0.0
  %842 = vmatprep.subr.mxu0 0.0
  %843 = vmatpush1.msra.mxu0 0.0
  %844 = vmatprep.subr.mxu0 0.0
  %845 = vmatpush1.msra.mxu0 0.0
  %846 = vmatprep.subr.mxu0 0.0
  %847 = vmatpush1.msra.mxu0 0.0
  %848 = vmatprep.subr.mxu0 0.0
  %849 = vmatpush1.msra.mxu0 0.0
  %850 = vmatprep.mubr.f32.mxu0 0.0
  %851 = vmatmul.mubr.f32.gmra.mrb[0].mxu0 %v775
  %v852 = vpop.f32.mrb[0].mxu0
  %v853 = vadd.f32 0.0, %v852
  %v854 = vpop.f32.mrb[0].mxu0
  %855 = vmatprep.mubr.f32.mxu0 0.0
  %856 = vmatmul.mubr.f32.gmra.mrb[0].mxu0 %v778
  %v857 = vpop.f32.mrb[0].mxu0
  %v858 = vadd.f32 0.0, %v857
  %v859 = vpop.f32.mrb[0].mxu0
  %860 = vmatprep.mubr.f32.mxu0 0.0
  %861 = vmatmul.mubr.f32.gmra.mrb[0].mxu0 %v781
  %v862 = vpop.f32.mrb[0].mxu0
  %v863 = vadd.f32 0.0, %v862
  %v864 = vpop.f32.mrb[0].mxu0
  %865 = vmatprep.mubr.f32.mxu0 0.0
  %866 = vmatmul.mubr.f32.gmra.mrb[0].mxu0 %v784
  %v867 = vpop.f32.mrb[0].mxu0
  %v868 = vadd.f32 0.0, %v867
  %v869 = vpop.f32.mrb[0].mxu0
  %870 = vdwg.mxu0
  %v871 = vmul.f32 %v853, %v402
  %v872 = vmul.f32 %v858, %v404
  %v873 = vmul.f32 %v863, %v398
  %v874 = vmul.f32 %v868, %v400
  %v875 = vadd.f32 %v766, %v871
  %v876 = vadd.f32 %v767, %v872
  %v877 = vadd.f32 %v768, %v873
  %v878 = vadd.f32 %v769, %v874
  %v879 = vld [vmem:[%s7] sm:$0xff]
  %v880 = vld [vmem:[%s7 + $0x8] sm:$0xff]
  %v881 = vld [vmem:[%s7 + $0x10] sm:$0xff]
  %v882 = vld [vmem:[%s7 + $0x18] sm:$0xff]
  %v883 = vld [vmem:[%s8] sm:$0x1]
  %v885 = vlaneseq
  %v886 = vshrl.u32 %v885, 7
  %v887 = vsub.s32 0, %v886
  %v888 = vrot.slane %v883, %v887
  %v891 = vsel %vm199, %v875, 0
  %v894 = vsel %vm199, %v876, 0
  %v897 = vsel %vm199, %v877, 0
  %v900 = vsel %vm199, %v878, 0
  %902 = vmatprep.subr.mxu0 0.0
  %903 = vmatpush1.msra.mxu0 %v879
  %904 = vmatprep.subr.mxu0 0.0
  %905 = vmatpush1.msra.mxu0 %v880
  %906 = vmatprep.subr.mxu0 0.0
  %907 = vmatpush1.msra.mxu0 %v881
  %908 = vmatprep.subr.mxu0 0.0
  %909 = vmatpush1.msra.mxu0 %v882
  %910 = vmatprep.subr.mxu0 0.0
  %911 = vmatpush1.msra.mxu0 0.0
  %912 = vmatprep.subr.mxu0 0.0
  %913 = vmatpush1.msra.mxu0 0.0
  %914 = vmatprep.subr.mxu0 0.0
  %915 = vmatpush1.msra.mxu0 0.0
  %916 = vmatprep.subr.mxu0 0.0
  %917 = vmatpush1.msra.mxu0 0.0
  %918 = vmatprep.subr.mxu0 0.0
  %919 = vmatpush1.msra.mxu0 0.0
  %920 = vmatprep.subr.mxu0 0.0
  %921 = vmatpush1.msra.mxu0 0.0
  %922 = vmatprep.subr.mxu0 0.0
  %923 = vmatpush1.msra.mxu0 0.0
  %924 = vmatprep.subr.mxu0 0.0
  %925 = vmatpush1.msra.mxu0 0.0
  %926 = vmatprep.subr.mxu0 0.0
  %927 = vmatpush1.msra.mxu0 0.0
  %928 = vmatprep.subr.mxu0 0.0
  %929 = vmatpush1.msra.mxu0 0.0
  %930 = vmatprep.subr.mxu0 0.0
  %931 = vmatpush1.msra.mxu0 0.0
  %932 = vmatprep.subr.mxu0 0.0
  %933 = vmatpush1.msra.mxu0 0.0
  %934 = vmatprep.subr.mxu0 0.0
  %935 = vmatpush1.msra.mxu0 0.0
  %936 = vmatprep.subr.mxu0 0.0
  %937 = vmatpush1.msra.mxu0 0.0
  %938 = vmatprep.subr.mxu0 0.0
  %939 = vmatpush1.msra.mxu0 0.0
  %940 = vmatprep.subr.mxu0 0.0
  %941 = vmatpush1.msra.mxu0 0.0
  %942 = vmatprep.subr.mxu0 0.0
  %943 = vmatpush1.msra.mxu0 0.0
  %944 = vmatprep.subr.mxu0 0.0
  %945 = vmatpush1.msra.mxu0 0.0
  %946 = vmatprep.subr.mxu0 0.0
  %947 = vmatpush1.msra.mxu0 0.0
  %948 = vmatprep.subr.mxu0 0.0
  %949 = vmatpush1.msra.mxu0 0.0
  %950 = vmatprep.subr.mxu0 0.0
  %951 = vmatpush1.msra.mxu0 0.0
  %952 = vmatprep.subr.mxu0 0.0
  %953 = vmatpush1.msra.mxu0 0.0
  %954 = vmatprep.subr.mxu0 0.0
  %955 = vmatpush1.msra.mxu0 0.0
  %956 = vmatprep.subr.mxu0 0.0
  %957 = vmatpush1.msra.mxu0 0.0
  %958 = vmatprep.subr.mxu0 0.0
  %959 = vmatpush1.msra.mxu0 0.0
  %960 = vmatprep.subr.mxu0 0.0
  %961 = vmatpush1.msra.mxu0 0.0
  %962 = vmatprep.subr.mxu0 0.0
  %963 = vmatpush1.msra.mxu0 0.0
  %964 = vmatprep.subr.mxu0 0.0
  %965 = vmatpush1.msra.mxu0 0.0
  %966 = vmatprep.mubr.f32.mxu0 0.0
  %967 = vmatmul.mubr.f32.gmra.mrb[0].mxu0 %v891
  %v968 = vpop.f32.mrb[0].mxu0
  %v969 = vadd.f32 %v888, %v968
  %v970 = vpop.f32.mrb[0].mxu0
  %971 = vmatprep.mubr.f32.mxu0 0.0
  %972 = vmatmul.mubr.f32.gmra.mrb[0].mxu0 %v894
  %v973 = vpop.f32.mrb[0].mxu0
  %v974 = vadd.f32 %v888, %v973
  %v975 = vpop.f32.mrb[0].mxu0
  %976 = vmatprep.mubr.f32.mxu0 0.0
  %977 = vmatmul.mubr.f32.gmra.mrb[0].mxu0 %v897
  %v978 = vpop.f32.mrb[0].mxu0
  %v979 = vadd.f32 %v888, %v978
  %v980 = vpop.f32.mrb[0].mxu0
  %981 = vmatprep.mubr.f32.mxu0 0.0
  %982 = vmatmul.mubr.f32.gmra.mrb[0].mxu0 %v900
  %v983 = vpop.f32.mrb[0].mxu0
  %v984 = vadd.f32 %v888, %v983
  %v985 = vpop.f32.mrb[0].mxu0
  %986 = vdwg.mxu0
  %v987 = vadd.f32 %v179, %v969
  %v988 = vadd.f32 %v184, %v974
  %v989 = vadd.f32 %v189, %v979
  %v990 = vadd.f32 %v194, %v984
  %v991 = vld [vmem:[%s11] sm:$0x1]
  %v992 = vld [vmem:[%s12] sm:$0x1]
  %v993 = vsel %vm199, %v987, 0.0
  %994 = vadd.xlane.f32.xlu0 %v993
  %v995 = vpop.xlane.xlu0 %994
  %v996 = vsel %vm199, %v988, 0.0
  %997 = vadd.xlane.f32.xlu0 %v996
  %v998 = vpop.xlane.xlu0 %997
  %v999 = vsel %vm199, %v989, 0.0
  %1000 = vadd.xlane.f32.xlu0 %v999
  %v1001 = vpop.xlane.xlu0 %1000
  %v1002 = vsel %vm199, %v990, 0.0
  %1003 = vadd.xlane.f32.xlu0 %v1002
  %v1004 = vpop.xlane.xlu0 %1003
  %v1005 = vmul.f32 %v995, %v212
  %v1006 = vmul.f32 %v998, %v212
  %v1007 = vmul.f32 %v1001, %v212
  %v1008 = vmul.f32 %v1004, %v212
  %v1009 = vsub.f32 %v987, %v1005
  %v1010 = vsub.f32 %v988, %v1006
  %v1011 = vsub.f32 %v989, %v1007
  %v1012 = vsub.f32 %v990, %v1008
  %v1013 = vmul.f32 %v1009, %v1009
  %v1014 = vmul.f32 %v1010, %v1010
  %v1015 = vmul.f32 %v1011, %v1011
  %v1016 = vmul.f32 %v1012, %v1012
  %v1017 = vsel %vm199, %v1013, 0.0
  %1018 = vadd.xlane.f32.xlu0 %v1017
  %v1019 = vpop.xlane.xlu0 %1018
  %v1020 = vsel %vm199, %v1014, 0.0
  %1021 = vadd.xlane.f32.xlu0 %v1020
  %v1022 = vpop.xlane.xlu0 %1021
  %v1023 = vsel %vm199, %v1015, 0.0
  %1024 = vadd.xlane.f32.xlu0 %v1023
  %v1025 = vpop.xlane.xlu0 %1024
  %v1026 = vsel %vm199, %v1016, 0.0
  %1027 = vadd.xlane.f32.xlu0 %v1026
  %v1028 = vpop.xlane.xlu0 %1027
  %v1029 = vmul.f32 %v1019, %v212
  %v1030 = vmul.f32 %v1022, %v212
  %v1031 = vmul.f32 %v1025, %v212
  %v1032 = vmul.f32 %v1028, %v212
  %v1033 = vadd.f32 %v1029, 1e-05
  %v1034 = vadd.f32 %v1030, 1e-05
  %v1035 = vadd.f32 %v1031, 1e-05
  %v1036 = vadd.f32 %v1032, 1e-05
  %v1037 = vrsqrt.pop %v1033
  %v1038 = vrsqrt.pop %v1034
  %v1039 = vrsqrt.pop %v1035
  %v1040 = vrsqrt.pop %v1036
  %v1041 = vmul.f32 %v1009, %v1037
  %v1042 = vmul.f32 %v1010, %v1038
  %v1043 = vmul.f32 %v1011, %v1039
  %v1044 = vmul.f32 %v1012, %v1040
  %v1046 = vlaneseq
  %v1047 = vshrl.u32 %v1046, 7
  %v1048 = vsub.s32 0, %v1047
  %v1049 = vrot.slane %v991, %v1048
  %v1051 = vmul.f32 %v1041, %v1049
  %v1052 = vmul.f32 %v1042, %v1049
  %v1053 = vmul.f32 %v1043, %v1049
  %v1054 = vmul.f32 %v1044, %v1049
  %v1056 = vlaneseq
  %v1057 = vshrl.u32 %v1056, 7
  %v1058 = vsub.s32 0, %v1057
  %v1059 = vrot.slane %v992, %v1058
  %v1061 = vadd.f32 %v1051, %v1059
  %v1062 = vadd.f32 %v1052, %v1059
  %v1063 = vadd.f32 %v1053, %v1059
  %v1064 = vadd.f32 %v1054, %v1059
  %v1065 = vld [vmem:[%s13] sm:$0xff]
  %v1066 = vld [vmem:[%s13 + $0x8] sm:$0xff]
  %v1067 = vld [vmem:[%s13 + $0x10] sm:$0xff]
  %v1068 = vld [vmem:[%s13 + $0x18] sm:$0xff]
  %v1069 = vld [vmem:[%s14] sm:$0x1]
  %v1071 = vlaneseq
  %v1072 = vshrl.u32 %v1071, 7
  %v1073 = vsub.s32 0, %v1072
  %v1074 = vrot.slane %v1069, %v1073
  %v1077 = vsel %vm199, %v1061, 0
  %v1080 = vsel %vm199, %v1062, 0
  %v1083 = vsel %vm199, %v1063, 0
  %v1086 = vsel %vm199, %v1064, 0
  %1088 = vmatprep.subr.mxu0 0.0
  %1089 = vmatpush1.msra.mxu0 %v1065
  %1090 = vmatprep.subr.mxu0 0.0
  %1091 = vmatpush1.msra.mxu0 %v1066
  %1092 = vmatprep.subr.mxu0 0.0
  %1093 = vmatpush1.msra.mxu0 %v1067
  %1094 = vmatprep.subr.mxu0 0.0
  %1095 = vmatpush1.msra.mxu0 %v1068
  %1096 = vmatprep.subr.mxu0 0.0
  %1097 = vmatpush1.msra.mxu0 0.0
  %1098 = vmatprep.subr.mxu0 0.0
  %1099 = vmatpush1.msra.mxu0 0.0
  %1100 = vmatprep.subr.mxu0 0.0
  %1101 = vmatpush1.msra.mxu0 0.0
  %1102 = vmatprep.subr.mxu0 0.0
  %1103 = vmatpush1.msra.mxu0 0.0
  %1104 = vmatprep.subr.mxu0 0.0
  %1105 = vmatpush1.msra.mxu0 0.0
  %1106 = vmatprep.subr.mxu0 0.0
  %1107 = vmatpush1.msra.mxu0 0.0
  %1108 = vmatprep.subr.mxu0 0.0
  %1109 = vmatpush1.msra.mxu0 0.0
  %1110 = vmatprep.subr.mxu0 0.0
  %1111 = vmatpush1.msra.mxu0 0.0
  %1112 = vmatprep.subr.mxu0 0.0
  %1113 = vmatpush1.msra.mxu0 0.0
  %1114 = vmatprep.subr.mxu0 0.0
  %1115 = vmatpush1.msra.mxu0 0.0
  %1116 = vmatprep.subr.mxu0 0.0
  %1117 = vmatpush1.msra.mxu0 0.0
  %1118 = vmatprep.subr.mxu0 0.0
  %1119 = vmatpush1.msra.mxu0 0.0
  %1120 = vmatprep.subr.mxu0 0.0
  %1121 = vmatpush1.msra.mxu0 0.0
  %1122 = vmatprep.subr.mxu0 0.0
  %1123 = vmatpush1.msra.mxu0 0.0
  %1124 = vmatprep.subr.mxu0 0.0
  %1125 = vmatpush1.msra.mxu0 0.0
  %1126 = vmatprep.subr.mxu0 0.0
  %1127 = vmatpush1.msra.mxu0 0.0
  %1128 = vmatprep.subr.mxu0 0.0
  %1129 = vmatpush1.msra.mxu0 0.0
  %1130 = vmatprep.subr.mxu0 0.0
  %1131 = vmatpush1.msra.mxu0 0.0
  %1132 = vmatprep.subr.mxu0 0.0
  %1133 = vmatpush1.msra.mxu0 0.0
  %1134 = vmatprep.subr.mxu0 0.0
  %1135 = vmatpush1.msra.mxu0 0.0
  %1136 = vmatprep.subr.mxu0 0.0
  %1137 = vmatpush1.msra.mxu0 0.0
  %1138 = vmatprep.subr.mxu0 0.0
  %1139 = vmatpush1.msra.mxu0 0.0
  %1140 = vmatprep.subr.mxu0 0.0
  %1141 = vmatpush1.msra.mxu0 0.0
  %1142 = vmatprep.subr.mxu0 0.0
  %1143 = vmatpush1.msra.mxu0 0.0
  %1144 = vmatprep.subr.mxu0 0.0
  %1145 = vmatpush1.msra.mxu0 0.0
  %1146 = vmatprep.subr.mxu0 0.0
  %1147 = vmatpush1.msra.mxu0 0.0
  %1148 = vmatprep.subr.mxu0 0.0
  %1149 = vmatpush1.msra.mxu0 0.0
  %1150 = vmatprep.subr.mxu0 0.0
  %1151 = vmatpush1.msra.mxu0 0.0
  %1152 = vmatprep.mubr.f32.mxu0 0.0
  %1153 = vmatmul.mubr.f32.gmra.mrb[0].mxu0 %v1077
  %v1154 = vpop.f32.mrb[0].mxu0
  %v1155 = vadd.f32 %v1074, %v1154
  %v1156 = vpop.f32.mrb[0].mxu0
  %1157 = vmatprep.mubr.f32.mxu0 0.0
  %1158 = vmatmul.mubr.f32.gmra.mrb[0].mxu0 %v1080
  %v1159 = vpop.f32.mrb[0].mxu0
  %v1160 = vadd.f32 %v1074, %v1159
  %v1161 = vpop.f32.mrb[0].mxu0
  %1162 = vmatprep.mubr.f32.mxu0 0.0
  %1163 = vmatmul.mubr.f32.gmra.mrb[0].mxu0 %v1083
  %v1164 = vpop.f32.mrb[0].mxu0
  %v1165 = vadd.f32 %v1074, %v1164
  %v1166 = vpop.f32.mrb[0].mxu0
  %1167 = vmatprep.mubr.f32.mxu0 0.0
  %1168 = vmatmul.mubr.f32.gmra.mrb[0].mxu0 %v1086
  %v1169 = vpop.f32.mrb[0].mxu0
  %v1170 = vadd.f32 %v1074, %v1169
  %v1171 = vpop.f32.mrb[0].mxu0
  %1172 = vdwg.mxu0
  %v1173 = vmax.f32 %v1155, 0.0
  %v1174 = vmax.f32 %v1160, 0.0
  %v1175 = vmax.f32 %v1165, 0.0
  %v1176 = vmax.f32 %v1170, 0.0
  %v1177 = vld [vmem:[%s15] sm:$0xff]
  %v1178 = vld [vmem:[%s15 + $0x8] sm:$0xff]
  %v1179 = vld [vmem:[%s15 + $0x10] sm:$0xff]
  %v1180 = vld [vmem:[%s15 + $0x18] sm:$0xff]
  %v1181 = vld [vmem:[%s15 + $0x20] sm:$0xff]
  %v1182 = vld [vmem:[%s15 + $0x28] sm:$0xff]
  %v1183 = vld [vmem:[%s15 + $0x30] sm:$0xff]
  %v1184 = vld [vmem:[%s15 + $0x38] sm:$0xff]
  %v1185 = vld [vmem:[%s16] sm:$0x1]
  %v1187 = vlaneseq
  %v1188 = vshrl.u32 %v1187, 7
  %v1189 = vsub.s32 0, %v1188
  %v1190 = vrot.slane %v1185, %v1189
  %vm1192 = vcmask 523264
  %v1194 = vsel %vm1192, %v1173, 0
  %v1197 = vsel %vm1192, %v1174, 0
  %v1200 = vsel %vm1192, %v1175, 0
  %v1203 = vsel %vm1192, %v1176, 0
  %1205 = vmatprep.subr.mxu0 0.0
  %1206 = vmatpush1.msra.mxu0 %v1177
  %1207 = vmatprep.subr.mxu0 0.0
  %1208 = vmatpush1.msra.mxu0 %v1178
  %1209 = vmatprep.subr.mxu0 0.0
  %1210 = vmatpush1.msra.mxu0 %v1179
  %1211 = vmatprep.subr.mxu0 0.0
  %1212 = vmatpush1.msra.mxu0 %v1180
  %1213 = vmatprep.subr.mxu0 0.0
  %1214 = vmatpush1.msra.mxu0 %v1181
  %1215 = vmatprep.subr.mxu0 0.0
  %1216 = vmatpush1.msra.mxu0 %v1182
  %1217 = vmatprep.subr.mxu0 0.0
  %1218 = vmatpush1.msra.mxu0 %v1183
  %1219 = vmatprep.subr.mxu0 0.0
  %1220 = vmatpush1.msra.mxu0 %v1184
  %1221 = vmatprep.subr.mxu0 0.0
  %1222 = vmatpush1.msra.mxu0 0.0
  %1223 = vmatprep.subr.mxu0 0.0
  %1224 = vmatpush1.msra.mxu0 0.0
  %1225 = vmatprep.subr.mxu0 0.0
  %1226 = vmatpush1.msra.mxu0 0.0
  %1227 = vmatprep.subr.mxu0 0.0
  %1228 = vmatpush1.msra.mxu0 0.0
  %1229 = vmatprep.subr.mxu0 0.0
  %1230 = vmatpush1.msra.mxu0 0.0
  %1231 = vmatprep.subr.mxu0 0.0
  %1232 = vmatpush1.msra.mxu0 0.0
  %1233 = vmatprep.subr.mxu0 0.0
  %1234 = vmatpush1.msra.mxu0 0.0
  %1235 = vmatprep.subr.mxu0 0.0
  %1236 = vmatpush1.msra.mxu0 0.0
  %1237 = vmatprep.subr.mxu0 0.0
  %1238 = vmatpush1.msra.mxu0 0.0
  %1239 = vmatprep.subr.mxu0 0.0
  %1240 = vmatpush1.msra.mxu0 0.0
  %1241 = vmatprep.subr.mxu0 0.0
  %1242 = vmatpush1.msra.mxu0 0.0
  %1243 = vmatprep.subr.mxu0 0.0
  %1244 = vmatpush1.msra.mxu0 0.0
  %1245 = vmatprep.subr.mxu0 0.0
  %1246 = vmatpush1.msra.mxu0 0.0
  %1247 = vmatprep.subr.mxu0 0.0
  %1248 = vmatpush1.msra.mxu0 0.0
  %1249 = vmatprep.subr.mxu0 0.0
  %1250 = vmatpush1.msra.mxu0 0.0
  %1251 = vmatprep.subr.mxu0 0.0
  %1252 = vmatpush1.msra.mxu0 0.0
  %1253 = vmatprep.subr.mxu0 0.0
  %1254 = vmatpush1.msra.mxu0 0.0
  %1255 = vmatprep.subr.mxu0 0.0
  %1256 = vmatpush1.msra.mxu0 0.0
  %1257 = vmatprep.subr.mxu0 0.0
  %1258 = vmatpush1.msra.mxu0 0.0
  %1259 = vmatprep.subr.mxu0 0.0
  %1260 = vmatpush1.msra.mxu0 0.0
  %1261 = vmatprep.subr.mxu0 0.0
  %1262 = vmatpush1.msra.mxu0 0.0
  %1263 = vmatprep.subr.mxu0 0.0
  %1264 = vmatpush1.msra.mxu0 0.0
  %1265 = vmatprep.subr.mxu0 0.0
  %1266 = vmatpush1.msra.mxu0 0.0
  %1267 = vmatprep.subr.mxu0 0.0
  %1268 = vmatpush1.msra.mxu0 0.0
  %1269 = vmatprep.mubr.f32.mxu0 0.0
  %1270 = vmatmul.mubr.f32.gmra.mrb[0].mxu0 %v1194
  %v1271 = vpop.f32.mrb[0].mxu0
  %v1272 = vadd.f32 %v1190, %v1271
  %v1273 = vpop.f32.mrb[0].mxu0
  %1274 = vmatprep.mubr.f32.mxu0 0.0
  %1275 = vmatmul.mubr.f32.gmra.mrb[0].mxu0 %v1197
  %v1276 = vpop.f32.mrb[0].mxu0
  %v1277 = vadd.f32 %v1190, %v1276
  %v1278 = vpop.f32.mrb[0].mxu0
  %1279 = vmatprep.mubr.f32.mxu0 0.0
  %1280 = vmatmul.mubr.f32.gmra.mrb[0].mxu0 %v1200
  %v1281 = vpop.f32.mrb[0].mxu0
  %v1282 = vadd.f32 %v1190, %v1281
  %v1283 = vpop.f32.mrb[0].mxu0
  %1284 = vmatprep.mubr.f32.mxu0 0.0
  %1285 = vmatmul.mubr.f32.gmra.mrb[0].mxu0 %v1203
  %v1286 = vpop.f32.mrb[0].mxu0
  %v1287 = vadd.f32 %v1190, %v1286
  %v1288 = vpop.f32.mrb[0].mxu0
  %1289 = vdwg.mxu0
  %v1290 = vadd.f32 %v987, %v1272
  %v1291 = vadd.f32 %v988, %v1277
  %v1292 = vadd.f32 %v989, %v1282
  %v1293 = vadd.f32 %v990, %v1287
  %v1294 = vld [vmem:[%s17] sm:$0xff]
  %v1295 = vld [vmem:[%s17 + $0x8] sm:$0xff]
  %v1296 = vld [vmem:[%s17 + $0x10] sm:$0xff]
  %v1297 = vld [vmem:[%s17 + $0x18] sm:$0xff]
  %v1298 = vld [vmem:[%s18] sm:$0x1]
  %v1300 = vlaneseq
  %v1301 = vshrl.u32 %v1300, 7
  %v1302 = vsub.s32 0, %v1301
  %v1303 = vrot.slane %v1298, %v1302
  %v1306 = vsel %vm199, %v1290, 0
  %v1309 = vsel %vm199, %v1291, 0
  %v1312 = vsel %vm199, %v1292, 0
  %v1315 = vsel %vm199, %v1293, 0
  %1317 = vmatprep.subr.mxu0 0.0
  %1318 = vmatpush1.msra.mxu0 %v1294
  %1319 = vmatprep.subr.mxu0 0.0
  %1320 = vmatpush1.msra.mxu0 %v1295
  %1321 = vmatprep.subr.mxu0 0.0
  %1322 = vmatpush1.msra.mxu0 %v1296
  %1323 = vmatprep.subr.mxu0 0.0
  %1324 = vmatpush1.msra.mxu0 %v1297
  %1325 = vmatprep.subr.mxu0 0.0
  %1326 = vmatpush1.msra.mxu0 0.0
  %1327 = vmatprep.subr.mxu0 0.0
  %1328 = vmatpush1.msra.mxu0 0.0
  %1329 = vmatprep.subr.mxu0 0.0
  %1330 = vmatpush1.msra.mxu0 0.0
  %1331 = vmatprep.subr.mxu0 0.0
  %1332 = vmatpush1.msra.mxu0 0.0
  %1333 = vmatprep.subr.mxu0 0.0
  %1334 = vmatpush1.msra.mxu0 0.0
  %1335 = vmatprep.subr.mxu0 0.0
  %1336 = vmatpush1.msra.mxu0 0.0
  %1337 = vmatprep.subr.mxu0 0.0
  %1338 = vmatpush1.msra.mxu0 0.0
  %1339 = vmatprep.subr.mxu0 0.0
  %1340 = vmatpush1.msra.mxu0 0.0
  %1341 = vmatprep.subr.mxu0 0.0
  %1342 = vmatpush1.msra.mxu0 0.0
  %1343 = vmatprep.subr.mxu0 0.0
  %1344 = vmatpush1.msra.mxu0 0.0
  %1345 = vmatprep.subr.mxu0 0.0
  %1346 = vmatpush1.msra.mxu0 0.0
  %1347 = vmatprep.subr.mxu0 0.0
  %1348 = vmatpush1.msra.mxu0 0.0
  %1349 = vmatprep.subr.mxu0 0.0
  %1350 = vmatpush1.msra.mxu0 0.0
  %1351 = vmatprep.subr.mxu0 0.0
  %1352 = vmatpush1.msra.mxu0 0.0
  %1353 = vmatprep.subr.mxu0 0.0
  %1354 = vmatpush1.msra.mxu0 0.0
  %1355 = vmatprep.subr.mxu0 0.0
  %1356 = vmatpush1.msra.mxu0 0.0
  %1357 = vmatprep.subr.mxu0 0.0
  %1358 = vmatpush1.msra.mxu0 0.0
  %1359 = vmatprep.subr.mxu0 0.0
  %1360 = vmatpush1.msra.mxu0 0.0
  %1361 = vmatprep.subr.mxu0 0.0
  %1362 = vmatpush1.msra.mxu0 0.0
  %1363 = vmatprep.subr.mxu0 0.0
  %1364 = vmatpush1.msra.mxu0 0.0
  %1365 = vmatprep.subr.mxu0 0.0
  %1366 = vmatpush1.msra.mxu0 0.0
  %1367 = vmatprep.subr.mxu0 0.0
  %1368 = vmatpush1.msra.mxu0 0.0
  %1369 = vmatprep.subr.mxu0 0.0
  %1370 = vmatpush1.msra.mxu0 0.0
  %1371 = vmatprep.subr.mxu0 0.0
  %1372 = vmatpush1.msra.mxu0 0.0
  %1373 = vmatprep.subr.mxu0 0.0
  %1374 = vmatpush1.msra.mxu0 0.0
  %1375 = vmatprep.subr.mxu0 0.0
  %1376 = vmatpush1.msra.mxu0 0.0
  %1377 = vmatprep.subr.mxu0 0.0
  %1378 = vmatpush1.msra.mxu0 0.0
  %1379 = vmatprep.subr.mxu0 0.0
  %1380 = vmatpush1.msra.mxu0 0.0
  %1381 = vmatprep.mubr.f32.mxu0 0.0
  %1382 = vmatmul.mubr.f32.gmra.mrb[0].mxu0 %v1306
  %v1383 = vpop.f32.mrb[0].mxu0
  %v1384 = vadd.f32 %v1303, %v1383
  %v1385 = vpop.f32.mrb[0].mxu0
  %1386 = vmatprep.mubr.f32.mxu0 0.0
  %1387 = vmatmul.mubr.f32.gmra.mrb[0].mxu0 %v1309
  %v1388 = vpop.f32.mrb[0].mxu0
  %v1389 = vadd.f32 %v1303, %v1388
  %v1390 = vpop.f32.mrb[0].mxu0
  %1391 = vmatprep.mubr.f32.mxu0 0.0
  %1392 = vmatmul.mubr.f32.gmra.mrb[0].mxu0 %v1312
  %v1393 = vpop.f32.mrb[0].mxu0
  %v1394 = vadd.f32 %v1303, %v1393
  %v1395 = vpop.f32.mrb[0].mxu0
  %1396 = vmatprep.mubr.f32.mxu0 0.0
  %1397 = vmatmul.mubr.f32.gmra.mrb[0].mxu0 %v1315
  %v1398 = vpop.f32.mrb[0].mxu0
  %v1399 = vadd.f32 %v1303, %v1398
  %v1400 = vpop.f32.mrb[0].mxu0
  %1401 = vdwg.mxu0
  %1402 = vst [vmem:[%s19] sm:$0xff] %v1384
  %1403 = vst [vmem:[%s19 + $0x8] sm:$0xff] %v1389
  %1404 = vst [vmem:[%s19 + $0x10] sm:$0xff] %v1394
  %1405 = vst [vmem:[%s19 + $0x18] sm:$0xff] %v1399
  // Predicated region
  $region78: #{model_forward.1} parent=0 // pred_check
    _
  $region79: #{model_forward.1} parent=0 // pred_check_branch
    %1407 = sbr.rel (0) target = $region81
  $region80: #{model_forward.1} parent=0 // pred_region
    _
  $region81: #{model_forward.1} parent=0 // pred_fallthru
    _
  // Predicated region
  $region82: #{model_forward.1} parent=0 // pred_check
    _
  $region83: #{model_forward.1} parent=0 // pred_check_branch
    %1409 = sbr.rel (0) target = $region85
  $region84: #{model_forward.1} parent=0 // pred_region
    _
  $region85: #{model_forward.1} parent=0 // pred_fallthru
    _

</llo_original>
